<compile_context>
chip_gen: v6e
topology: v6e:2x2x1
jax: 0.10.0
libtpu: 0.0.40
codegen_flags: <defaults>
</compile_context>

<pallas_src>
import jax
import jax.numpy as jnp
from jax.experimental import pallas as pl
from jax.experimental.pallas import tpu as pltpu


# ---------------------------------------------------------------------------
# Kernel: one fused LightGCN layer row-block
#   layer_i = adj_i,: @ emb ;  sum_out_i = sum_in_i + layer_i ;  next_i = bf16(layer_i)
# ---------------------------------------------------------------------------
def lgn_layer_kernel(adj_ref, emb_ref, sum_in_ref, sum_out_ref, next_ref, acc_ref):
    """adj_ref    : (TM, TK)  bf16  streamed adjacency tile (grid axis 1 = K)
       emb_ref    : (Np, Dp)  bf16  current-layer embeddings, VMEM resident
       sum_in_ref : (TM, Dp)  f32   running layer sum (aliased with sum_out)
       sum_out_ref: (TM, Dp)  f32
       next_ref   : (TM, Dp)  bf16  this layer's result, pre-cast for next layer
       acc_ref    : (TM, Dp)  f32   VMEM scratch accumulator for the K reduction
    """
    k = pl.program_id(1)

    @pl.when(k == 0)
    def _():
        acc_ref[...] = jnp.zeros_like(acc_ref)

    tk = adj_ref.shape[1]
    koff = pl.multiple_of(k * tk, tk)
    acc_ref[...] += jnp.dot(adj_ref[...], emb_ref[pl.ds(koff, tk), :],
                            preferred_element_type=jnp.float32)

    @pl.when(k == pl.num_programs(1) - 1)
    def _():
        layer = acc_ref[...]
        sum_out_ref[...] = sum_in_ref[...] + layer
        next_ref[...] = layer.astype(next_ref.dtype)


# ---------------------------------------------------------------------------
# Tiling / VMEM budgeting
# ---------------------------------------------------------------------------
def _round_up(x, m):
    return ((x + m - 1) // m) * m


def _vmem_capacity_bytes():
    try:
        return int(pltpu.get_tpu_info().vmem_capacity_bytes)
    except Exception:
        return 64 << 20  # conservative fallback (v7x per-TensorCore VMEM)


def _select_tiling(n, d, tm=None, tk=None):
    """Pick padded sizes and adjacency tile sizes for the dense LGN layer."""
    dp = _round_up(max(d, 128), 128)          # lane-dense output stores
    cap = _vmem_capacity_bytes()
    if tm is None or tk is None:
        # HBM-bound workload: multi-MiB adj tiles to amortize per-step overhead.
        #   128 MiB VMEM chips (v5e/v6e): 1024x2048 bf16 adj tile (4 MiB)
        #    64 MiB VMEM chips (v7x)    : 2048x2048 bf16 adj tile (8 MiB)
        tm_t, tk_t = (1024, 2048) if cap >= (100 << 20) else (2048, 2048)
    else:
        tm_t, tk_t = tm, tk

    base = _round_up(n, 128)
    tm_ = max(128, min(_round_up(tm_t, 128), base))
    tk_ = max(128, min(_round_up(tk_t, 128), base))
    if max(tm_, tk_) % min(tm_, tk_) != 0:    # keep mutual divisibility
        tk_ = tm_
    n_pad = _round_up(n, max(tm_, tk_))

    # Megacore balance: keep an even (>= 2) number of row tiles when possible.
    rt = n_pad // tm_
    if rt > 1 and rt % 2 == 1 and tm_ >= 256:
        tm_ //= 2

    def need(tm__, tk__):
        return (2 * tm__ * tk__ * 2           # adj tile, bf16, 2 pipeline buffers
                + 2 * n_pad * dp * 2          # resident emb slab, bf16 (2 copies)
                + 2 * tm__ * dp * 4           # running-sum in,  f32
                + 2 * tm__ * dp * 4           # running-sum out, f32
                + 2 * tm__ * dp * 2           # next-layer emb out, bf16
                + tm__ * dp * 4)              # f32 K-reduction scratch

    budget = int(cap * 0.85)
    while need(tm_, tk_) > budget and tk_ > 256:
        tk_ //= 2
    while need(tm_, tk_) > budget and tm_ > 256:
        tm_ //= 2
    return n_pad, dp, tm_, tk_, need(tm_, tk_), cap


def _make_lgn_layer(n_pad, dp, tm, tk, vmem_need, vmem_cap):
    grid = (n_pad // tm, n_pad // tk)         # (row tiles, K tiles) — K LAST
    vmem_limit = int(min(max(vmem_need + (8 << 20), 32 << 20),
                         int(vmem_cap * 0.9)))
    return pl.pallas_call(
        lgn_layer_kernel,
        out_shape=(jax.ShapeDtypeStruct((n_pad, dp), jnp.float32),   # running sum
                   jax.ShapeDtypeStruct((n_pad, dp), jnp.bfloat16)), # next layer
        grid_spec=pltpu.PrefetchScalarGridSpec(
            num_scalar_prefetch=0,
            grid=grid,
            in_specs=[
                pl.BlockSpec((tm, tk), lambda i, k: (i, k)),      # adj: streamed
                pl.BlockSpec((n_pad, dp), lambda i, k: (0, 0)),   # emb: resident
                pl.BlockSpec((tm, dp), lambda i, k: (i, 0)),      # running sum in
            ],
            out_specs=[
                pl.BlockSpec((tm, dp), lambda i, k: (i, 0)),      # running sum out
                pl.BlockSpec((tm, dp), lambda i, k: (i, 0)),      # next-layer bf16
            ],
            scratch_shapes=[pltpu.VMEM((tm, dp), jnp.float32)],
        ),
        input_output_aliases={2: 0},          # running sum accumulates in place
        compiler_params=pltpu.CompilerParams(
            dimension_semantics=("parallel", "arbitrary"),
            vmem_limit_bytes=vmem_limit,
        ),
    )


# ---------------------------------------------------------------------------
# Forward pass
# ---------------------------------------------------------------------------
def lgn_forward(adj, ego_emb, num_layers, *, tm=None, tk=None):
    """LightGCN propagation + layer mean.  adj: (N,N), ego_emb: (N,D)."""
    n, d = ego_emb.shape
    assert adj.shape == (n, n)
    n_pad, dp, tm_, tk_, vneed, cap = _select_tiling(n, d, tm, tk)

    adj_p = jnp.zeros((n_pad, n_pad), jnp.bfloat16)
    adj_p = adj_p.at[:n, :n].set(adj.astype(jnp.bfloat16))
    ego_p = jnp.zeros((n_pad, dp), jnp.float32)
    ego_p = ego_p.at[:n, :d].set(ego_emb.astype(jnp.float32))

    layer_fn = _make_lgn_layer(n_pad, dp, tm_, tk_, vneed, cap)

    run_sum = ego_p                            # f32 running layer sum (incl. e_0)
    cur_bf = ego_p.astype(jnp.bfloat16)        # bf16 stream for the next matmul
    for _ in range(num_layers):
        run_sum, cur_bf = layer_fn(adj_p, cur_bf, run_sum)
    mean = run_sum * (1.0 / float(num_layers + 1))
    return mean[:n, :d]


def llard_forward(adj, user_emb, item_emb, *, num_user, num_item, gcn_layer,
                  model="LGN", tm=None, tk=None):
    """Equivalent of LLaRD.forward(adj_matrix, g_type, kr).  g_type only selects
    which embedding tables feed `ego`; the caller passes the chosen pair."""
    ego = jnp.concatenate([user_emb, item_emb], axis=0).astype(jnp.float32)
    if model == "GMF":
        return ego[:num_user], ego[num_user:]
    mean_emb = lgn_forward(adj, ego, gcn_layer, tm=tm, tk=tk)
    return mean_emb[:num_user], mean_emb[num_user:]


# ---------------------------------------------------------------------------
# Pure-JAX references
# ---------------------------------------------------------------------------
def _reference_forward_f32(adj, user_emb, item_emb, num_user, gcn_layer):
    ego = jnp.concatenate([user_emb, item_emb], axis=0).astype(jnp.float32)
    all_emb = [ego]
    for _ in range(gcn_layer):
        all_emb.append(adj @ all_emb[-1])
    mean_emb = jnp.mean(jnp.stack(all_emb, axis=1), axis=1)
    return mean_emb[:num_user], mean_emb[num_user:]


def _reference_forward_bf16(adj, user_emb, item_emb, num_user, gcn_layer):
    """Reference matching the kernel's bf16-stream / f32-accumulate numerics."""
    ego = jnp.concatenate([user_emb, item_emb], axis=0).astype(jnp.float32)
    adj_bf = adj.astype(jnp.bfloat16)
    all_emb = [ego]
    for _ in range(gcn_layer):
        nxt = jnp.dot(adj_bf, all_emb[-1].astype(jnp.bfloat16),
                      preferred_element_type=jnp.float32)
        all_emb.append(nxt)
    mean_emb = jnp.mean(jnp.stack(all_emb, axis=1), axis=1)
    return mean_emb[:num_user], mean_emb[num_user:]


if __name__ == "__main__":
    # Small synthetic config consistent with the module's __init__.
    num_user, num_item = 192, 320            # N = 512
    latent_dim = 32
    gcn_layer = 2
    N = num_user + num_item

    key = jax.random.PRNGKey(0)
    k_ue, k_ie, k_r = jax.random.split(key, 3)

    # nn.init.normal_(std=0.01) equivalents for the embedding tables.
    user_embeddings = 0.01 * jax.random.normal(k_ue, (num_user, latent_dim),
                                               dtype=jnp.float32)
    item_embeddings = 0.01 * jax.random.normal(k_ie, (num_item, latent_dim),
                                               dtype=jnp.float32)

    # Synthetic user-item interactions -> symmetric-normalized LightGCN
    # adjacency  A = D^{-1/2} [[0, R], [R^T, 0]] D^{-1/2}, densified.
    R = (jax.random.uniform(k_r, (num_user, num_item)) < 0.05).astype(jnp.float32)
    A = jnp.zeros((N, N), dtype=jnp.float32)
    A = A.at[:num_user, num_user:].set(R)
    A = A.at[num_user:, :num_user].set(R.T)
    deg = jnp.maximum(A.sum(axis=1), 1.0)
    d_inv_sqrt = 1.0 / jnp.sqrt(deg)
    adj = A * d_inv_sqrt[:, None] * d_inv_sqrt[None, :]

    fwd = jax.jit(llard_forward,
                  static_argnames=("num_user", "num_item", "gcn_layer",
                                   "model", "tm", "tk"))

    # Run 1: explicit 256x256 tiles so the 512x512 adjacency exercises a real
    # (2, 2) grid (even row-tile count, multi-step K reduction, resident emb).
    user_out, item_out = fwd(adj, user_embeddings, item_embeddings,
                             num_user=num_user, num_item=num_item,
                             gcn_layer=gcn_layer, model="LGN", tm=256, tk=256)
    jax.block_until_ready((user_out, item_out))

    # Run 2: auto (per-generation) tile selection path.
    user_auto, item_auto = fwd(adj, user_embeddings, item_embeddings,
                               num_user=num_user, num_item=num_item,
                               gcn_layer=gcn_layer, model="LGN")
    jax.block_until_ready((user_auto, item_auto))

    assert user_out.shape == (num_user, latent_dim)
    assert item_out.shape == (num_item, latent_dim)

    # Tight check against a reference with identical bf16-stream numerics.
    bf_user, bf_item = _reference_forward_bf16(adj, user_embeddings,
                                               item_embeddings, num_user,
                                               gcn_layer)
    assert jnp.allclose(user_out, bf_user, atol=5e-5, rtol=1e-2)
    assert jnp.allclose(item_out, bf_item, atol=5e-5, rtol=1e-2)
    assert jnp.allclose(user_auto, bf_user, atol=5e-5, rtol=1e-2)
    assert jnp.allclose(item_auto, bf_item, atol=5e-5, rtol=1e-2)

    # Looser sanity check against the exact f32 PyTorch-equivalent reference
    # (tolerance loosened because the adjacency is streamed in bf16).
    f32_user, f32_item = _reference_forward_f32(adj, user_embeddings,
                                                item_embeddings, num_user,
                                                gcn_layer)
    assert jnp.allclose(user_out, f32_user, atol=2e-3, rtol=1e-1)
    assert jnp.allclose(item_out, f32_item, atol=2e-3, rtol=1e-1)

    # GMF branch is a pure split of the ego embeddings (no propagation).
    gmf_user, gmf_item = llard_forward(adj, user_embeddings, item_embeddings,
                                       num_user=num_user, num_item=num_item,
                                       gcn_layer=gcn_layer, model="GMF")
    assert jnp.allclose(gmf_user, user_embeddings)
    assert jnp.allclose(gmf_item, item_embeddings)

    print("KERNEL_OK")
</pallas_src>

<mosaic_0001>
module attributes {stable_mosaic.version = 11 : i64} {
  func.func @lgn_layer_kernel(%arg0: i32, %arg1: i32, %arg2: memref<256x256xbf16, #tpu.memory_space<vmem>>, %arg3: memref<512x128xbf16, #tpu.memory_space<vmem>>, %arg4: memref<256x128xf32, #tpu.memory_space<vmem>>, %arg5: memref<256x128xf32, #tpu.memory_space<vmem>>, %arg6: memref<256x128xbf16, #tpu.memory_space<vmem>>, %arg7: memref<256x128xf32, #tpu.memory_space<vmem>>) attributes {dimension_semantics = [#tpu.dimension_semantics<parallel>, #tpu.dimension_semantics<arbitrary>], iteration_bounds = array<i64: 2, 2>, scalar_prefetch = 0 : i64, scratch_operands = 1 : i64, tpu.core_type = #tpu.core_type<tc>, window_params = [{transform_indices = @transform_0, window_bounds = array<i64: 256, 256>}, {pipeline_mode = #tpu.pipeline_mode<synchronous>, transform_indices = @transform_1, window_bounds = array<i64: 512, 128>}, {transform_indices = @transform_2, window_bounds = array<i64: 256, 128>}, {transform_indices = @transform_3, window_bounds = array<i64: 256, 128>}, {transform_indices = @transform_4, window_bounds = array<i64: 256, 128>}]} {
    %c0_i32 = arith.constant 0 : i32
    %0 = arith.cmpi eq, %arg1, %c0_i32 : i32
    %1 = arith.extui %0 : i1 to i32
    %c0_i32_0 = arith.constant 0 : i32
    %2 = arith.cmpi ne, %1, %c0_i32_0 : i32
    scf.if %2 {
      %cst_8 = arith.constant 0.000000e+00 : f32
      %15 = vector.broadcast %cst_8 : f32 to vector<256x128xf32>
      %c0_9 = arith.constant 0 : index
      %c0_10 = arith.constant 0 : index
      %16 = vector.load %arg7[%c0_9, %c0_10] : memref<256x128xf32, #tpu.memory_space<vmem>>, vector<256x128xf32>
      tpu.vector_store %arg7[%c0_9, %c0_10], %15 {strides = array<i32>} : memref<256x128xf32, #tpu.memory_space<vmem>>, vector<256x128xf32>,
    } else {
    }
    %c256_i32 = arith.constant 256 : i32
    %3 = arith.muli %arg1, %c256_i32 : i32
    %4 = tpu.assume_multiple %3, 256 : i32
    %c0 = arith.constant 0 : index
    %c0_1 = arith.constant 0 : index
    %5 = vector.load %arg7[%c0, %c0_1] : memref<256x128xf32, #tpu.memory_space<vmem>>, vector<256x128xf32>
    %c0_2 = arith.constant 0 : index
    %c0_3 = arith.constant 0 : index
    %6 = vector.load %arg2[%c0_2, %c0_3] : memref<256x256xbf16, #tpu.memory_space<vmem>>, vector<256x256xbf16>
    %7 = arith.index_cast %4 : i32 to index
    %c0_4 = arith.constant 0 : index
    %8 = vector.load %arg3[%7, %c0_4] : memref<512x128xbf16, #tpu.memory_space<vmem>>, vector<256x128xbf16>
    %cst = arith.constant dense<0.000000e+00> : vector<256x128xf32>
    %9 = tpu.matmul %6, %8, %cst {dimension_numbers = #tpu.dot_dimension_numbers<[1], [0], [0], [1], [0, 0, 1, 1], [], []>} : vector<256x256xbf16>, vector<256x128xbf16>, vector<256x128xf32> -> vector<256x128xf32>
    %10 = arith.addf %5, %9 : vector<256x128xf32>
    %c0_5 = arith.constant 0 : index
    %c0_6 = arith.constant 0 : index
    %11 = vector.load %arg7[%c0_5, %c0_6] : memref<256x128xf32, #tpu.memory_space<vmem>>, vector<256x128xf32>
    tpu.vector_store %arg7[%c0_5, %c0_6], %10 {strides = array<i32>} : memref<256x128xf32, #tpu.memory_space<vmem>>, vector<256x128xf32>,
    %c1_i32 = arith.constant 1 : i32
    %12 = arith.cmpi eq, %arg1, %c1_i32 : i32
    %13 = arith.extui %12 : i1 to i32
    %c0_i32_7 = arith.constant 0 : i32
    %14 = arith.cmpi ne, %13, %c0_i32_7 : i32
    scf.if %14 {
      %c0_8 = arith.constant 0 : index
      %c0_9 = arith.constant 0 : index
      %15 = vector.load %arg7[%c0_8, %c0_9] : memref<256x128xf32, #tpu.memory_space<vmem>>, vector<256x128xf32>
      %c0_10 = arith.constant 0 : index
      %c0_11 = arith.constant 0 : index
      %16 = vector.load %arg4[%c0_10, %c0_11] : memref<256x128xf32, #tpu.memory_space<vmem>>, vector<256x128xf32>
      %17 = arith.addf %16, %15 : vector<256x128xf32>
      %c0_12 = arith.constant 0 : index
      %c0_13 = arith.constant 0 : index
      %18 = vector.load %arg5[%c0_12, %c0_13] : memref<256x128xf32, #tpu.memory_space<vmem>>, vector<256x128xf32>
      tpu.vector_store %arg5[%c0_12, %c0_13], %17 {strides = array<i32>} : memref<256x128xf32, #tpu.memory_space<vmem>>, vector<256x128xf32>,
      %19 = arith.truncf %15 : vector<256x128xf32> to vector<256x128xbf16>
      %c0_14 = arith.constant 0 : index
      %c0_15 = arith.constant 0 : index
      %20 = vector.load %arg6[%c0_14, %c0_15] : memref<256x128xbf16, #tpu.memory_space<vmem>>, vector<256x128xbf16>
      tpu.vector_store %arg6[%c0_14, %c0_15], %19 {strides = array<i32>} : memref<256x128xbf16, #tpu.memory_space<vmem>>, vector<256x128xbf16>,
    } else {
    }
    return
  }
  func.func @transform_0(%arg0: i32, %arg1: i32) -> (i32, i32) {
    %c0_i32 = arith.constant 0 : i32
    return %arg0, %arg1 : i32, i32
  }
  func.func @transform_1(%arg0: i32, %arg1: i32) -> (i32, i32) {
    %c0_i32 = arith.constant 0 : i32
    %c0_i32_0 = arith.constant 0 : i32
    %c0_i32_1 = arith.constant 0 : i32
    return %c0_i32, %c0_i32_0 : i32, i32
  }
  func.func @transform_2(%arg0: i32, %arg1: i32) -> (i32, i32) {
    %c0_i32 = arith.constant 0 : i32
    %c0_i32_0 = arith.constant 0 : i32
    return %arg0, %c0_i32 : i32, i32
  }
  func.func @transform_3(%arg0: i32, %arg1: i32) -> (i32, i32) {
    %c0_i32 = arith.constant 0 : i32
    %c0_i32_0 = arith.constant 0 : i32
    return %arg0, %c0_i32 : i32, i32
  }
  func.func @transform_4(%arg0: i32, %arg1: i32) -> (i32, i32) {
    %c0_i32 = arith.constant 0 : i32
    %c0_i32_0 = arith.constant 0 : i32
    return %arg0, %c0_i32 : i32, i32
  }
}

module attributes {stable_mosaic.version = 11 : i64} {
  func.func @lgn_layer_kernel(%arg0: i32, %arg1: i32, %arg2: memref<256x256xbf16, #tpu.memory_space<vmem>>, %arg3: memref<512x128xbf16, #tpu.memory_space<vmem>>, %arg4: memref<256x128xf32, #tpu.memory_space<vmem>>, %arg5: memref<256x128xf32, #tpu.memory_space<vmem>>, %arg6: memref<256x128xbf16, #tpu.memory_space<vmem>>, %arg7: memref<256x128xf32, #tpu.memory_space<vmem>>) attributes {dimension_semantics = [#tpu.dimension_semantics<parallel>, #tpu.dimension_semantics<arbitrary>], iteration_bounds = array<i64: 2, 2>, scalar_prefetch = 0 : i64, scratch_operands = 1 : i64, tpu.core_type = #tpu.core_type<tc>, window_params = [{transform_indices = @transform_0, window_bounds = array<i64: 256, 256>}, {pipeline_mode = #tpu.pipeline_mode<synchronous>, transform_indices = @transform_1, window_bounds = array<i64: 512, 128>}, {transform_indices = @transform_2, window_bounds = array<i64: 256, 128>}, {transform_indices = @transform_3, window_bounds = array<i64: 256, 128>}, {transform_indices = @transform_4, window_bounds = array<i64: 256, 128>}]} {
    %c0_i32 = arith.constant 0 : i32
    %0 = arith.cmpi eq, %arg1, %c0_i32 : i32
    %1 = arith.extui %0 : i1 to i32
    %c0_i32_0 = arith.constant 0 : i32
    %2 = arith.cmpi ne, %1, %c0_i32_0 : i32
    scf.if %2 {
      %cst_8 = arith.constant 0.000000e+00 : f32
      %15 = vector.broadcast %cst_8 : f32 to vector<256x128xf32>
      %c0_9 = arith.constant 0 : index
      %c0_10 = arith.constant 0 : index
      %16 = vector.load %arg7[%c0_9, %c0_10] : memref<256x128xf32, #tpu.memory_space<vmem>>, vector<256x128xf32>
      tpu.vector_store %arg7[%c0_9, %c0_10], %15 {strides = array<i32>} : memref<256x128xf32, #tpu.memory_space<vmem>>, vector<256x128xf32>,
    } else {
    }
    %c256_i32 = arith.constant 256 : i32
    %3 = arith.muli %arg1, %c256_i32 : i32
    %4 = tpu.assume_multiple %3, 256 : i32
    %c0 = arith.constant 0 : index
    %c0_1 = arith.constant 0 : index
    %5 = vector.load %arg7[%c0, %c0_1] : memref<256x128xf32, #tpu.memory_space<vmem>>, vector<256x128xf32>
    %c0_2 = arith.constant 0 : index
    %c0_3 = arith.constant 0 : index
    %6 = vector.load %arg2[%c0_2, %c0_3] : memref<256x256xbf16, #tpu.memory_space<vmem>>, vector<256x256xbf16>
    %7 = arith.index_cast %4 : i32 to index
    %c0_4 = arith.constant 0 : index
    %8 = vector.load %arg3[%7, %c0_4] : memref<512x128xbf16, #tpu.memory_space<vmem>>, vector<256x128xbf16>
    %cst = arith.constant dense<0.000000e+00> : vector<256x128xf32>
    %9 = tpu.matmul %6, %8, %cst {dimension_numbers = #tpu.dot_dimension_numbers<[1], [0], [0], [1], [0, 0, 1, 1], [], []>} : vector<256x256xbf16>, vector<256x128xbf16>, vector<256x128xf32> -> vector<256x128xf32>
    %10 = arith.addf %5, %9 : vector<256x128xf32>
    %c0_5 = arith.constant 0 : index
    %c0_6 = arith.constant 0 : index
    %11 = vector.load %arg7[%c0_5, %c0_6] : memref<256x128xf32, #tpu.memory_space<vmem>>, vector<256x128xf32>
    tpu.vector_store %arg7[%c0_5, %c0_6], %10 {strides = array<i32>} : memref<256x128xf32, #tpu.memory_space<vmem>>, vector<256x128xf32>,
    %c1_i32 = arith.constant 1 : i32
    %12 = arith.cmpi eq, %arg1, %c1_i32 : i32
    %13 = arith.extui %12 : i1 to i32
    %c0_i32_7 = arith.constant 0 : i32
    %14 = arith.cmpi ne, %13, %c0_i32_7 : i32
    scf.if %14 {
      %c0_8 = arith.constant 0 : index
      %c0_9 = arith.constant 0 : index
      %15 = vector.load %arg7[%c0_8, %c0_9] : memref<256x128xf32, #tpu.memory_space<vmem>>, vector<256x128xf32>
      %c0_10 = arith.constant 0 : index
      %c0_11 = arith.constant 0 : index
      %16 = vector.load %arg4[%c0_10, %c0_11] : memref<256x128xf32, #tpu.memory_space<vmem>>, vector<256x128xf32>
      %17 = arith.addf %16, %15 : vector<256x128xf32>
      %c0_12 = arith.constant 0 : index
      %c0_13 = arith.constant 0 : index
      %18 = vector.load %arg5[%c0_12, %c0_13] : memref<256x128xf32, #tpu.memory_space<vmem>>, vector<256x128xf32>
      tpu.vector_store %arg5[%c0_12, %c0_13], %17 {strides = array<i32>} : memref<256x128xf32, #tpu.memory_space<vmem>>, vector<256x128xf32>,
      %19 = arith.truncf %15 : vector<256x128xf32> to vector<256x128xbf16>
      %c0_14 = arith.constant 0 : index
      %c0_15 = arith.constant 0 : index
      %20 = vector.load %arg6[%c0_14, %c0_15] : memref<256x128xbf16, #tpu.memory_space<vmem>>, vector<256x128xbf16>
      tpu.vector_store %arg6[%c0_14, %c0_15], %19 {strides = array<i32>} : memref<256x128xbf16, #tpu.memory_space<vmem>>, vector<256x128xbf16>,
    } else {
    }
    return
  }
  func.func @transform_0(%arg0: i32, %arg1: i32) -> (i32, i32) {
    %c0_i32 = arith.constant 0 : i32
    return %arg0, %arg1 : i32, i32
  }
  func.func @transform_1(%arg0: i32, %arg1: i32) -> (i32, i32) {
    %c0_i32 = arith.constant 0 : i32
    %c0_i32_0 = arith.constant 0 : i32
    %c0_i32_1 = arith.constant 0 : i32
    return %c0_i32, %c0_i32_0 : i32, i32
  }
  func.func @transform_2(%arg0: i32, %arg1: i32) -> (i32, i32) {
    %c0_i32 = arith.constant 0 : i32
    %c0_i32_0 = arith.constant 0 : i32
    return %arg0, %c0_i32 : i32, i32
  }
  func.func @transform_3(%arg0: i32, %arg1: i32) -> (i32, i32) {
    %c0_i32 = arith.constant 0 : i32
    %c0_i32_0 = arith.constant 0 : i32
    return %arg0, %c0_i32 : i32, i32
  }
  func.func @transform_4(%arg0: i32, %arg1: i32) -> (i32, i32) {
    %c0_i32 = arith.constant 0 : i32
    %c0_i32_0 = arith.constant 0 : i32
    return %arg0, %c0_i32 : i32, i32
  }
}

</mosaic_0001>

<llo_original>
// kernel: llard_forward.3
$region0: #{llard_forward.3}
  #allocation0 [shape = 'u32[]', space=smem, size = 0x4, offset = 0x4, fixed_abs, tag = 'smem constant byte address 0x4 - core index']
  #allocation1 [shape = 'u32[144,128]{1,0:T(1,128)}', space=vmem, size = 0x12000, scoped, tag = 'internal scratch']
  #allocation2 [shape = 'f32[256,128]{1,0:T(8,128)}', space=vmem, size = 0x20000, scoped, tag = 'scratch operand']
  %s0 = inlined_call_operand.vmem [shape: bf16[512,512], index: 0, kind: input, shape index: {}]
  %s1 = inlined_call_operand.vmem [shape: bf16[512,128], index: 1, kind: input, shape index: {}]
  %s2 = inlined_call_operand.vmem [shape: f32[512,128], index: 2, kind: input, shape index: {}, may-alias: {2,3}]
  %s3 = inlined_call_operand.vmem [shape: f32[512,128], index: 3, kind: output, shape index: {0}, may-alias: {2,3}]
  %s4 = inlined_call_operand.hbm [shape: bf16[512,128], index: 4, kind: output, shape index: {1}]
  %5 = xla_tuple %s3, %s4
  %s6 = sld [smem:[#allocation0]]
  $region99: #{llard_forward.3} parent=0
    _
  %s8 = ssub.s32 1, %s6
  %s9 = scalar_select 0, %s8, %s6
  $region1: #{llard_forward.3} parent=0
    #allocation3 [shape = 'u8[262144]{0}', space=vmem, size = 0x40000, scoped, tag = 'input window, operand 0']
    #allocation4 [shape = 'u8[131072]{0}', space=vmem, size = 0x20000, scoped, tag = 'output window, operand 1']
    #allocation5 [shape = 's32[2]{0}', space=sflag, size = 0x8, scoped, tag = 'scoped memory for llard_forward.3']
    %10 = vsyncpa [#allocation5], 0
    %s11 = scalar_lea.sflag [#allocation5], 1
    %12 = vsyncpa %s11, 0
    loop: start=0, step=1, limit=6
    $region2: #{llard_forward.3} parent=1 // loop_pre_header
      _
    $region3: #{llard_forward.3} parent=1 // loop_header
      %s14 = sphi 0, %s18
      %p15 = scmp.ge.s32.totalorder %s14, 6
      %s21 = sphi 0, %s33
      %s22 = sphi 0, %s29
      %s23 = sphi 0, %s21
      %s24 = sphi 0, %s22
      %s25 = sphi 0, %s23
      %s26 = sphi 0, %s24
      %s38 = sphi 0, %s40
      %s41 = sphi 0, %s38
      %s42 = sphi 0, %s41
      %s58 = sphi 0, %s42
      %s62 = sphi 0, %s62
      %s64 = sphi 0, %s62
      %s65 = sphi 0, %s64
      %s79 = sphi 0, %s65
      %s85 = sphi 0, %s87
      %s88 = sphi 0, %s85
      %s89 = sphi 0, %s88
      %s105 = sphi 0, %s89
      %s111 = sphi 0, %s113
      %s114 = sphi 0, %s111
      %s115 = sphi 0, %s114
      %s131 = sphi 0, %s115
      %s137 = sphi 0, %s139
      %s140 = sphi 0, %s137
      %s141 = sphi 0, %s140
      %s157 = sphi 0, %s141
    $region4: #{llard_forward.3} parent=1 // loop_header_branch
      %17 = sbr.rel (%p15) target = $region8
    $region5: #{llard_forward.3} parent=1 // loop_body
      %s19 = ssub.s32 %s14, 1
      %s20 = ssub.s32 %s14, 2
      %s27 = sadd.s32 1, %s22
      %p28 = scmp.ge.s32.totalorder %s27, 2
      %s29 = scalar_select %p28, 0, %s27
      %s30 = sadd.s32 1, %s21
      %s31 = scalar_select %p28, %s30, %s21
      %p32 = scmp.ge.s32.totalorder %s31, 2
      %s33 = scalar_select %p32, 0, %s31
      %s34 = ssub.s32 %s21, %s33
      %s35 = ssub.s32 %s22, %s29
      %s36 = sor.u32 %s34, %s35
      %p37 = scmp.eq.s32.totalorder %s36, 0
      %s39 = sadd.s32 %s38, 1
      %s40 = scalar_select %p37, %s38, %s39
      %p43 = pneg %p37
      %p44 = scmp.eq.s32.totalorder %s14, 3
      %p45 = por %p43, %p44
      %p46 = scmp.ne.s32.totalorder %s38, %s41
      %p47 = scmp.eq.s32.totalorder %s14, 0
      %p48 = por %p46, %p47
      %p49 = scmp.ne.s32.totalorder %s38, %s41
      %p50 = scmp.eq.s32.totalorder %s19, 3
      %p51 = por %p49, %p50
      %p52 = scmp.ne.s32.totalorder %s41, %s42
      %p53 = scmp.eq.s32.totalorder %s19, 0
      %p54 = por %p52, %p53
      %p55 = scmp.ne.s32.totalorder %s41, %s42
      %p56 = scmp.eq.s32.totalorder %s20, 3
      %p57 = por %p55, %p56
      %p59 = scmp.ne.s32.totalorder %s42, %s58
      %p60 = scmp.eq.s32.totalorder %s20, 0
      %p61 = por %p59, %p60
      %s63 = sadd.s32 %s62, 1
      %p66 = scmp.eq.s32.totalorder %s14, 3
      %p67 = scmp.ne.s32.totalorder %s62, %s64
      %p68 = scmp.eq.s32.totalorder %s14, 0
      %p69 = por %p67, %p68
      %p70 = scmp.ne.s32.totalorder %s62, %s64
      %p71 = scmp.eq.s32.totalorder %s19, 3
      %p72 = por %p70, %p71
      %p73 = scmp.ne.s32.totalorder %s64, %s65
      %p74 = scmp.eq.s32.totalorder %s19, 0
      %p75 = por %p73, %p74
      %p76 = scmp.ne.s32.totalorder %s64, %s65
      %p77 = scmp.eq.s32.totalorder %s20, 3
      %p78 = por %p76, %p77
      %p80 = scmp.ne.s32.totalorder %s65, %s79
      %p81 = scmp.eq.s32.totalorder %s20, 0
      %p82 = por %p80, %p81
      %s83 = ssub.s32 %s21, %s33
      %p84 = scmp.eq.s32.totalorder %s83, 0
      %s86 = sadd.s32 %s85, 1
      %s87 = scalar_select %p84, %s85, %s86
      %p90 = pneg %p84
      %p91 = scmp.eq.s32.totalorder %s14, 3
      %p92 = por %p90, %p91
      %p93 = scmp.ne.s32.totalorder %s85, %s88
      %p94 = scmp.eq.s32.totalorder %s14, 0
      %p95 = por %p93, %p94
      %p96 = scmp.ne.s32.totalorder %s85, %s88
      %p97 = scmp.eq.s32.totalorder %s19, 3
      %p98 = por %p96, %p97
      %p99 = scmp.ne.s32.totalorder %s88, %s89
      %p100 = scmp.eq.s32.totalorder %s19, 0
      %p101 = por %p99, %p100
      %p102 = scmp.ne.s32.totalorder %s88, %s89
      %p103 = scmp.eq.s32.totalorder %s20, 3
      %p104 = por %p102, %p103
      %p106 = scmp.ne.s32.totalorder %s89, %s105
      %p107 = scmp.eq.s32.totalorder %s20, 0
      %p108 = por %p106, %p107
      %s109 = ssub.s32 %s21, %s33
      %p110 = scmp.eq.s32.totalorder %s109, 0
      %s112 = sadd.s32 %s111, 1
      %s113 = scalar_select %p110, %s111, %s112
      %p116 = pneg %p110
      %p117 = scmp.eq.s32.totalorder %s14, 3
      %p118 = por %p116, %p117
      %p119 = scmp.ne.s32.totalorder %s111, %s114
      %p120 = scmp.eq.s32.totalorder %s14, 0
      %p121 = por %p119, %p120
      %p122 = scmp.ne.s32.totalorder %s111, %s114
      %p123 = scmp.eq.s32.totalorder %s19, 3
      %p124 = por %p122, %p123
      %p125 = scmp.ne.s32.totalorder %s114, %s115
      %p126 = scmp.eq.s32.totalorder %s19, 0
      %p127 = por %p125, %p126
      %p128 = scmp.ne.s32.totalorder %s114, %s115
      %p129 = scmp.eq.s32.totalorder %s20, 3
      %p130 = por %p128, %p129
      %p132 = scmp.ne.s32.totalorder %s115, %s131
      %p133 = scmp.eq.s32.totalorder %s20, 0
      %p134 = por %p132, %p133
      %s135 = ssub.s32 %s21, %s33
      %p136 = scmp.eq.s32.totalorder %s135, 0
      %s138 = sadd.s32 %s137, 1
      %s139 = scalar_select %p136, %s137, %s138
      %p142 = pneg %p136
      %p143 = scmp.eq.s32.totalorder %s14, 3
      %p144 = por %p142, %p143
      %p145 = scmp.ne.s32.totalorder %s137, %s140
      %p146 = scmp.eq.s32.totalorder %s14, 0
      %p147 = por %p145, %p146
      %p148 = scmp.ne.s32.totalorder %s137, %s140
      %p149 = scmp.eq.s32.totalorder %s19, 3
      %p150 = por %p148, %p149
      %p151 = scmp.ne.s32.totalorder %s140, %s141
      %p152 = scmp.eq.s32.totalorder %s19, 0
      %p153 = por %p151, %p152
      %p154 = scmp.ne.s32.totalorder %s140, %s141
      %p155 = scmp.eq.s32.totalorder %s20, 3
      %p156 = por %p154, %p155
      %p158 = scmp.ne.s32.totalorder %s141, %s157
      %p159 = scmp.eq.s32.totalorder %s20, 0
      %p160 = por %p158, %p159
      %p161 = scmp.le.s32.totalorder 1, %s14
      %p162 = scmp.lt.s32.totalorder %s14, 5
      %p163 = pnand %p161, %p162
      %p164 = pneg %p163
      // Predicated region
      $region9: #{llard_forward.3} parent=5 // pred_check
        _
      $region10: #{llard_forward.3} parent=5 // pred_check_branch
        %166 = sbr.rel (%p163) target = $region12
      $region11: #{llard_forward.3} parent=5 // pred_region
        %s167 = ssub.s32 %s14, 1
        // Predicated region
        $region13: #{llard_forward.3} parent=11 // pred_check
          %p168 = pneg %p75
        $region14: #{llard_forward.3} parent=11 // pred_check_branch
          %170 = sbr.rel (%p168) target = $region16
        $region15: #{llard_forward.3} parent=11 // pred_region
          _
        $region16: #{llard_forward.3} parent=11 // pred_fallthru
          _
      $region12: #{llard_forward.3} parent=5 // pred_fallthru
        _
      %p171 = scmp.lt.s32.totalorder %s14, 4
      // Predicated region
      $region17: #{llard_forward.3} parent=5 // pred_check
        %p172 = pneg %p171
      $region18: #{llard_forward.3} parent=5 // pred_check_branch
        %174 = sbr.rel (%p172) target = $region20
      $region19: #{llard_forward.3} parent=5 // pred_region
        // Predicated region
        $region21: #{llard_forward.3} parent=19 // pred_check
          %p175 = pneg %p48
        $region22: #{llard_forward.3} parent=19 // pred_check_branch
          %177 = sbr.rel (%p175) target = $region24
        $region23: #{llard_forward.3} parent=19 // pred_region
          %s178 = sand.u32 %s38, 1
          %s179 = sand.u32 %s38, 1
          %s180 = smul.addr %s179, 256
          %s181 = scalar_lea.vmem [#allocation3], %s180
          %s182 = smul.u32 32, %s21
          %s183 = smul.u32 2, %s22
          %s184 = smul.addr %s182, 4
          %s185 = sadd.s32 %s183, %s184
          %s186 = smul.addr %s185, 4
          %s187 = scalar_lea.vmem %s0, %s186
          // Predicated region
          $region25: #{llard_forward.3} parent=23 // pred_check
            _
          $region26: #{llard_forward.3} parent=23 // pred_check_branch
            %189 = sbr.rel (0) target = $region28
          $region27: #{llard_forward.3} parent=23 // pred_region
            // Predicated region
            $region29: #{llard_forward.3} parent=27 // pred_check
              _
            $region30: #{llard_forward.3} parent=27 // pred_check_branch
              %191 = sbr.rel (0) target = $region32
            $region31: #{llard_forward.3} parent=27 // pred_region
              // Predicated region
              $region44: #{llard_forward.3} parent=31 // pred_check
                _
              $region45: #{llard_forward.3} parent=31 // pred_check_branch
                %269 = sbr.rel (0) target = $region47
              $region46: #{llard_forward.3} parent=31 // pred_region
                loop: start=0, step=1, limit=1
                $region48: #{llard_forward.3} parent=46 // loop_pre_header
                  _
                $region49: #{llard_forward.3} parent=46 // loop_header
                  %s271 = sphi 0, %s275
                  %p272 = scmp.ge.s32.totalorder %s271, 1
                  %s276 = sphi %s187, %s187
                  %s277 = sphi %s181, %s181
                $region50: #{llard_forward.3} parent=46 // loop_header_branch
                  %274 = sbr.rel (%p272) target = $region54
                $region51: #{llard_forward.3} parent=46 // loop_body
                  %v278 = vld [vmem:[%s276] sm:$0xff]
                  %279 = vst [vmem:[%s277] sm:$0xff] %v278
                  %v280 = vld [vmem:[%s276 + $0x10] sm:$0xff]
                  %281 = vst [vmem:[%s277 + $0x8] sm:$0xff] %v280
                  %v282 = vld [vmem:[%s276 + $0x20] sm:$0xff]
                  %283 = vst [vmem:[%s277 + $0x10] sm:$0xff] %v282
                  %v284 = vld [vmem:[%s276 + $0x30] sm:$0xff]
                  %285 = vst [vmem:[%s277 + $0x18] sm:$0xff] %v284
                  %v286 = vld [vmem:[%s276 + $0x40] sm:$0xff]
                  %287 = vst [vmem:[%s277 + $0x20] sm:$0xff] %v286
                  %v288 = vld [vmem:[%s276 + $0x50] sm:$0xff]
                  %289 = vst [vmem:[%s277 + $0x28] sm:$0xff] %v288
                  %v290 = vld [vmem:[%s276 + $0x60] sm:$0xff]
                  %291 = vst [vmem:[%s277 + $0x30] sm:$0xff] %v290
                  %v292 = vld [vmem:[%s276 + $0x70] sm:$0xff]
                  %293 = vst [vmem:[%s277 + $0x38] sm:$0xff] %v292
                  %v294 = vld [vmem:[%s276 + $0x80] sm:$0xff]
                  %295 = vst [vmem:[%s277 + $0x40] sm:$0xff] %v294
                  %v296 = vld [vmem:[%s276 + $0x90] sm:$0xff]
                  %297 = vst [vmem:[%s277 + $0x48] sm:$0xff] %v296
                  %v298 = vld [vmem:[%s276 + $0xa0] sm:$0xff]
                  %299 = vst [vmem:[%s277 + $0x50] sm:$0xff] %v298
                  %v300 = vld [vmem:[%s276 + $0xb0] sm:$0xff]
                  %301 = vst [vmem:[%s277 + $0x58] sm:$0xff] %v300
                  %v302 = vld [vmem:[%s276 + $0xc0] sm:$0xff]
                  %303 = vst [vmem:[%s277 + $0x60] sm:$0xff] %v302
                  %v304 = vld [vmem:[%s276 + $0xd0] sm:$0xff]
                  %305 = vst [vmem:[%s277 + $0x68] sm:$0xff] %v304
                  %v306 = vld [vmem:[%s276 + $0xe0] sm:$0xff]
                  %307 = vst [vmem:[%s277 + $0x70] sm:$0xff] %v306
                  %v308 = vld [vmem:[%s276 + $0xf0] sm:$0xff]
                  %309 = vst [vmem:[%s277 + $0x78] sm:$0xff] %v308
                  %v310 = vld [vmem:[%s276 + $0x100] sm:$0xff]
                  %311 = vst [vmem:[%s277 + $0x80] sm:$0xff] %v310
                  %v312 = vld [vmem:[%s276 + $0x110] sm:$0xff]
                  %313 = vst [vmem:[%s277 + $0x88] sm:$0xff] %v312
                  %v314 = vld [vmem:[%s276 + $0x120] sm:$0xff]
                  %315 = vst [vmem:[%s277 + $0x90] sm:$0xff] %v314
                  %v316 = vld [vmem:[%s276 + $0x130] sm:$0xff]
                  %317 = vst [vmem:[%s277 + $0x98] sm:$0xff] %v316
                  %v318 = vld [vmem:[%s276 + $0x140] sm:$0xff]
                  %319 = vst [vmem:[%s277 + $0xa0] sm:$0xff] %v318
                  %v320 = vld [vmem:[%s276 + $0x150] sm:$0xff]
                  %321 = vst [vmem:[%s277 + $0xa8] sm:$0xff] %v320
                  %v322 = vld [vmem:[%s276 + $0x160] sm:$0xff]
                  %323 = vst [vmem:[%s277 + $0xb0] sm:$0xff] %v322
                  %v324 = vld [vmem:[%s276 + $0x170] sm:$0xff]
                  %325 = vst [vmem:[%s277 + $0xb8] sm:$0xff] %v324
                  %v326 = vld [vmem:[%s276 + $0x180] sm:$0xff]
                  %327 = vst [vmem:[%s277 + $0xc0] sm:$0xff] %v326
                  %v328 = vld [vmem:[%s276 + $0x190] sm:$0xff]
                  %329 = vst [vmem:[%s277 + $0xc8] sm:$0xff] %v328
                  %v330 = vld [vmem:[%s276 + $0x1a0] sm:$0xff]
                  %331 = vst [vmem:[%s277 + $0xd0] sm:$0xff] %v330
                  %v332 = vld [vmem:[%s276 + $0x1b0] sm:$0xff]
                  %333 = vst [vmem:[%s277 + $0xd8] sm:$0xff] %v332
                  %v334 = vld [vmem:[%s276 + $0x1c0] sm:$0xff]
                  %335 = vst [vmem:[%s277 + $0xe0] sm:$0xff] %v334
                  %v336 = vld [vmem:[%s276 + $0x1d0] sm:$0xff]
                  %337 = vst [vmem:[%s277 + $0xe8] sm:$0xff] %v336
                  %v338 = vld [vmem:[%s276 + $0x1e0] sm:$0xff]
                  %339 = vst [vmem:[%s277 + $0xf0] sm:$0xff] %v338
                  %v340 = vld [vmem:[%s276 + $0x1f0] sm:$0xff]
                  %341 = vst [vmem:[%s277 + $0xf8] sm:$0xff] %v340
                $region52: #{llard_forward.3} parent=46 // loop_footer
                  %s275 = sadd.s32 1, %s271
                $region53: #{llard_forward.3} parent=46 // loop_footer_branch
                  %270 = sbr.rel target = $region49
                $region54: #{llard_forward.3} parent=46 // loop_exit
                  _
              $region47: #{llard_forward.3} parent=31 // pred_fallthru
                _
              // Predicated region
              $region55: #{llard_forward.3} parent=31 // pred_check
                _
              $region56: #{llard_forward.3} parent=31 // pred_check_branch
                %343 = sbr.rel target = $region58
              $region57: #{llard_forward.3} parent=31 // pred_region
                _
              $region58: #{llard_forward.3} parent=31 // pred_fallthru
                _
            $region32: #{llard_forward.3} parent=27 // pred_fallthru
              _
            // Predicated region
            $region33: #{llard_forward.3} parent=27 // pred_check
              _
            $region34: #{llard_forward.3} parent=27 // pred_check_branch
              %193 = sbr.rel target = $region36
            $region35: #{llard_forward.3} parent=27 // pred_region
              %s195 = ssub.s32 256, 1
              loop: start=0, step=1, limit=1
              $region37: #{llard_forward.3} parent=35 // loop_pre_header
                _
              $region38: #{llard_forward.3} parent=35 // loop_header
                %s197 = sphi 0, %s201
                %p198 = scmp.ge.s32.totalorder %s197, 1
                %s202 = sphi %s187, %s187
                %s203 = sphi %s181, %s181
              $region39: #{llard_forward.3} parent=35 // loop_header_branch
                %200 = sbr.rel (%p198) target = $region43
              $region40: #{llard_forward.3} parent=35 // loop_body
                %v204 = vld [vmem:[%s202] sm:%s195]
                %205 = vst [vmem:[%s203] sm:%s195] %v204
                %v206 = vld [vmem:[%s202 + $0x10] sm:%s195]
                %207 = vst [vmem:[%s203 + $0x8] sm:%s195] %v206
                %v208 = vld [vmem:[%s202 + $0x20] sm:%s195]
                %209 = vst [vmem:[%s203 + $0x10] sm:%s195] %v208
                %v210 = vld [vmem:[%s202 + $0x30] sm:%s195]
                %211 = vst [vmem:[%s203 + $0x18] sm:%s195] %v210
                %v212 = vld [vmem:[%s202 + $0x40] sm:%s195]
                %213 = vst [vmem:[%s203 + $0x20] sm:%s195] %v212
                %v214 = vld [vmem:[%s202 + $0x50] sm:%s195]
                %215 = vst [vmem:[%s203 + $0x28] sm:%s195] %v214
                %v216 = vld [vmem:[%s202 + $0x60] sm:%s195]
                %217 = vst [vmem:[%s203 + $0x30] sm:%s195] %v216
                %v218 = vld [vmem:[%s202 + $0x70] sm:%s195]
                %219 = vst [vmem:[%s203 + $0x38] sm:%s195] %v218
                %v220 = vld [vmem:[%s202 + $0x80] sm:%s195]
                %221 = vst [vmem:[%s203 + $0x40] sm:%s195] %v220
                %v222 = vld [vmem:[%s202 + $0x90] sm:%s195]
                %223 = vst [vmem:[%s203 + $0x48] sm:%s195] %v222
                %v224 = vld [vmem:[%s202 + $0xa0] sm:%s195]
                %225 = vst [vmem:[%s203 + $0x50] sm:%s195] %v224
                %v226 = vld [vmem:[%s202 + $0xb0] sm:%s195]
                %227 = vst [vmem:[%s203 + $0x58] sm:%s195] %v226
                %v228 = vld [vmem:[%s202 + $0xc0] sm:%s195]
                %229 = vst [vmem:[%s203 + $0x60] sm:%s195] %v228
                %v230 = vld [vmem:[%s202 + $0xd0] sm:%s195]
                %231 = vst [vmem:[%s203 + $0x68] sm:%s195] %v230
                %v232 = vld [vmem:[%s202 + $0xe0] sm:%s195]
                %233 = vst [vmem:[%s203 + $0x70] sm:%s195] %v232
                %v234 = vld [vmem:[%s202 + $0xf0] sm:%s195]
                %235 = vst [vmem:[%s203 + $0x78] sm:%s195] %v234
                %v236 = vld [vmem:[%s202 + $0x100] sm:%s195]
                %237 = vst [vmem:[%s203 + $0x80] sm:%s195] %v236
                %v238 = vld [vmem:[%s202 + $0x110] sm:%s195]
                %239 = vst [vmem:[%s203 + $0x88] sm:%s195] %v238
                %v240 = vld [vmem:[%s202 + $0x120] sm:%s195]
                %241 = vst [vmem:[%s203 + $0x90] sm:%s195] %v240
                %v242 = vld [vmem:[%s202 + $0x130] sm:%s195]
                %243 = vst [vmem:[%s203 + $0x98] sm:%s195] %v242
                %v244 = vld [vmem:[%s202 + $0x140] sm:%s195]
                %245 = vst [vmem:[%s203 + $0xa0] sm:%s195] %v244
                %v246 = vld [vmem:[%s202 + $0x150] sm:%s195]
                %247 = vst [vmem:[%s203 + $0xa8] sm:%s195] %v246
                %v248 = vld [vmem:[%s202 + $0x160] sm:%s195]
                %249 = vst [vmem:[%s203 + $0xb0] sm:%s195] %v248
                %v250 = vld [vmem:[%s202 + $0x170] sm:%s195]
                %251 = vst [vmem:[%s203 + $0xb8] sm:%s195] %v250
                %v252 = vld [vmem:[%s202 + $0x180] sm:%s195]
                %253 = vst [vmem:[%s203 + $0xc0] sm:%s195] %v252
                %v254 = vld [vmem:[%s202 + $0x190] sm:%s195]
                %255 = vst [vmem:[%s203 + $0xc8] sm:%s195] %v254
                %v256 = vld [vmem:[%s202 + $0x1a0] sm:%s195]
                %257 = vst [vmem:[%s203 + $0xd0] sm:%s195] %v256
                %v258 = vld [vmem:[%s202 + $0x1b0] sm:%s195]
                %259 = vst [vmem:[%s203 + $0xd8] sm:%s195] %v258
                %v260 = vld [vmem:[%s202 + $0x1c0] sm:%s195]
                %261 = vst [vmem:[%s203 + $0xe0] sm:%s195] %v260
                %v262 = vld [vmem:[%s202 + $0x1d0] sm:%s195]
                %263 = vst [vmem:[%s203 + $0xe8] sm:%s195] %v262
                %v264 = vld [vmem:[%s202 + $0x1e0] sm:%s195]
                %265 = vst [vmem:[%s203 + $0xf0] sm:%s195] %v264
                %v266 = vld [vmem:[%s202 + $0x1f0] sm:%s195]
                %267 = vst [vmem:[%s203 + $0xf8] sm:%s195] %v266
              $region41: #{llard_forward.3} parent=35 // loop_footer
                %s201 = sadd.s32 1, %s197
              $region42: #{llard_forward.3} parent=35 // loop_footer_branch
                %196 = sbr.rel target = $region38
              $region43: #{llard_forward.3} parent=35 // loop_exit
                _
            $region36: #{llard_forward.3} parent=27 // pred_fallthru
              _
          $region28: #{llard_forward.3} parent=23 // pred_fallthru
            _
          %344 = vnop
        $region24: #{llard_forward.3} parent=19 // pred_fallthru
          _
        // Predicated region
        $region59: #{llard_forward.3} parent=19 // pred_check
          %p345 = pneg %p95
        $region60: #{llard_forward.3} parent=19 // pred_check_branch
          %347 = sbr.rel (%p345) target = $region62
        $region61: #{llard_forward.3} parent=19 // pred_region
          %s348 = smul.u32 32, %s21
          %p349 = scmp.lt.s32.totalorder %s348, 63
          %s350 = scalar_select %p349, %s348, 63
          %s351 = smul.addr %s350, 8
          %s352 = scalar_lea.vmem %s2, %s351
          %s353 = smul.u32 32, %s21
        $region62: #{llard_forward.3} parent=19 // pred_fallthru
          _
      $region20: #{llard_forward.3} parent=5 // pred_fallthru
        _
      %p354 = scmp.le.s32.totalorder 1, %s14
      %p355 = scmp.lt.s32.totalorder %s14, 5
      %p356 = pnand %p354, %p355
      %p357 = pneg %p356
      // Predicated region
      $region63: #{llard_forward.3} parent=5 // pred_check
        _
      $region64: #{llard_forward.3} parent=5 // pred_check_branch
        %359 = sbr.rel (%p356) target = $region66
      $region65: #{llard_forward.3} parent=5 // pred_region
        %s360 = ssub.s32 %s14, 1
        %s361 = sand.u32 %s41, 1
        %s362 = sand.u32 %s41, 1
        %s363 = smul.addr %s362, 256
        %s364 = scalar_lea.vmem [#allocation3], %s363
        // Predicated region
        $region67: #{llard_forward.3} parent=65 // pred_check
          %p365 = pneg %p54
        $region68: #{llard_forward.3} parent=65 // pred_check_branch
          %367 = sbr.rel (%p365) target = $region70
        $region69: #{llard_forward.3} parent=65 // pred_region
          _
        $region70: #{llard_forward.3} parent=65 // pred_fallthru
          _
        %s368 = sand.u32 %s41, 1
        %s369 = sand.u32 %s41, 1
        %s370 = smul.addr %s369, 256
        %s371 = scalar_lea.vmem [#allocation3], %s370
        %p372 = pneg %p54
        %p373 = pneg %p51
        %p374 = pneg %p75
        %p375 = pneg %p72
        %s376 = smul.u32 32, %s23
        %p377 = scmp.lt.s32.totalorder %s376, 63
        %s378 = scalar_select %p377, %s376, 63
        %s379 = smul.addr %s378, 8
        %s380 = scalar_lea.vmem %s2, %s379
        %p381 = pneg %p101
        %p382 = pneg %p98
        %p383 = pneg %p127
        %p384 = pneg %p124
        %s385 = smul.u32 32, %s23
        %p386 = scmp.lt.s32.totalorder %s385, 63
        %s387 = scalar_select %p386, %s385, 63
        %s388 = smul.addr %s387, 8
        %s389 = scalar_lea.vmem %s3, %s388
        %p390 = pneg %p153
        %p391 = pneg %p150
        %s392 = sand.u32 %s140, 1
        %s393 = scalar_lea.sflag [#allocation5], %s392
        %s394 = sand.u32 %s140, 1
        %s395 = smul.addr %s394, 128
        %s396 = scalar_lea.vmem [#allocation4], %s395
        %s397 = smul.u32 32, %s23
        %s398 = smul.u32 2, %s24
        %s399 = smul.u32 32, %s23
        %p400 = scmp.lt.s32.totalorder %s399, 63
        %s401 = scalar_select %p400, %s399, 63
        %s402 = smul.addr %s401, 8
        %s403 = scalar_lea.vmem %s2, %s402
        %s404 = smul.u32 32, %s23
        %s405 = smul.u32 32, %s23
        %p406 = scmp.lt.s32.totalorder %s405, 63
        %s407 = scalar_select %p406, %s405, 63
        %s408 = smul.addr %s407, 8
        %s409 = scalar_lea.vmem %s3, %s408
        %s410 = smul.u32 32, %s23
        %s411 = smul.u32 32, %s23
        %p413 = scmp.eq.s32.totalorder %s24, 0
        // Predicated region
        $region71: #{llard_forward.3} parent=65 // pred_check
          %p414 = pneg %p413
        $region72: #{llard_forward.3} parent=65 // pred_check_branch
          %416 = sbr.rel (%p414) target = $region74
        $region73: #{llard_forward.3} parent=65 // pred_region
          %417 = vst [vmem:[#allocation2] sm:$0xff] 0.0
          %418 = vst [vmem:[#allocation2 + $0x8] sm:$0xff] 0.0
          %419 = vst [vmem:[#allocation2 + $0x10] sm:$0xff] 0.0
          %420 = vst [vmem:[#allocation2 + $0x18] sm:$0xff] 0.0
          %421 = vst [vmem:[#allocation2 + $0x20] sm:$0xff] 0.0
          %422 = vst [vmem:[#allocation2 + $0x28] sm:$0xff] 0.0
          %423 = vst [vmem:[#allocation2 + $0x30] sm:$0xff] 0.0
          %424 = vst [vmem:[#allocation2 + $0x38] sm:$0xff] 0.0
          %425 = vst [vmem:[#allocation2 + $0x40] sm:$0xff] 0.0
          %426 = vst [vmem:[#allocation2 + $0x48] sm:$0xff] 0.0
          %427 = vst [vmem:[#allocation2 + $0x50] sm:$0xff] 0.0
          %428 = vst [vmem:[#allocation2 + $0x58] sm:$0xff] 0.0
          %429 = vst [vmem:[#allocation2 + $0x60] sm:$0xff] 0.0
          %430 = vst [vmem:[#allocation2 + $0x68] sm:$0xff] 0.0
          %431 = vst [vmem:[#allocation2 + $0x70] sm:$0xff] 0.0
          %432 = vst [vmem:[#allocation2 + $0x78] sm:$0xff] 0.0
          %433 = vst [vmem:[#allocation2 + $0x80] sm:$0xff] 0.0
          %434 = vst [vmem:[#allocation2 + $0x88] sm:$0xff] 0.0
          %435 = vst [vmem:[#allocation2 + $0x90] sm:$0xff] 0.0
          %436 = vst [vmem:[#allocation2 + $0x98] sm:$0xff] 0.0
          %437 = vst [vmem:[#allocation2 + $0xa0] sm:$0xff] 0.0
          %438 = vst [vmem:[#allocation2 + $0xa8] sm:$0xff] 0.0
          %439 = vst [vmem:[#allocation2 + $0xb0] sm:$0xff] 0.0
          %440 = vst [vmem:[#allocation2 + $0xb8] sm:$0xff] 0.0
          %441 = vst [vmem:[#allocation2 + $0xc0] sm:$0xff] 0.0
          %442 = vst [vmem:[#allocation2 + $0xc8] sm:$0xff] 0.0
          %443 = vst [vmem:[#allocation2 + $0xd0] sm:$0xff] 0.0
          %444 = vst [vmem:[#allocation2 + $0xd8] sm:$0xff] 0.0
          %445 = vst [vmem:[#allocation2 + $0xe0] sm:$0xff] 0.0
          %446 = vst [vmem:[#allocation2 + $0xe8] sm:$0xff] 0.0
          %447 = vst [vmem:[#allocation2 + $0xf0] sm:$0xff] 0.0
          %448 = vst [vmem:[#allocation2 + $0xf8] sm:$0xff] 0.0
        $region74: #{llard_forward.3} parent=65 // pred_fallthru
          _
        %s449 = smul.u32 %s24, 256
        %v450 = vld [vmem:[#allocation2] sm:$0xff]
        %v451 = vld [vmem:[#allocation2 + $0x8] sm:$0xff]
        %v452 = vld [vmem:[#allocation2 + $0x10] sm:$0xff]
        %v453 = vld [vmem:[#allocation2 + $0x18] sm:$0xff]
        %v454 = vld [vmem:[#allocation2 + $0x20] sm:$0xff]
        %v455 = vld [vmem:[#allocation2 + $0x28] sm:$0xff]
        %v456 = vld [vmem:[#allocation2 + $0x30] sm:$0xff]
        %v457 = vld [vmem:[#allocation2 + $0x38] sm:$0xff]
        %v458 = vld [vmem:[#allocation2 + $0x40] sm:$0xff]
        %v459 = vld [vmem:[#allocation2 + $0x48] sm:$0xff]
        %v460 = vld [vmem:[#allocation2 + $0x50] sm:$0xff]
        %v461 = vld [vmem:[#allocation2 + $0x58] sm:$0xff]
        %v462 = vld [vmem:[#allocation2 + $0x60] sm:$0xff]
        %v463 = vld [vmem:[#allocation2 + $0x68] sm:$0xff]
        %v464 = vld [vmem:[#allocation2 + $0x70] sm:$0xff]
        %v465 = vld [vmem:[#allocation2 + $0x78] sm:$0xff]
        %v466 = vld [vmem:[#allocation2 + $0x80] sm:$0xff]
        %v467 = vld [vmem:[#allocation2 + $0x88] sm:$0xff]
        %v468 = vld [vmem:[#allocation2 + $0x90] sm:$0xff]
        %v469 = vld [vmem:[#allocation2 + $0x98] sm:$0xff]
        %v470 = vld [vmem:[#allocation2 + $0xa0] sm:$0xff]
        %v471 = vld [vmem:[#allocation2 + $0xa8] sm:$0xff]
        %v472 = vld [vmem:[#allocation2 + $0xb0] sm:$0xff]
        %v473 = vld [vmem:[#allocation2 + $0xb8] sm:$0xff]
        %v474 = vld [vmem:[#allocation2 + $0xc0] sm:$0xff]
        %v475 = vld [vmem:[#allocation2 + $0xc8] sm:$0xff]
        %v476 = vld [vmem:[#allocation2 + $0xd0] sm:$0xff]
        %v477 = vld [vmem:[#allocation2 + $0xd8] sm:$0xff]
        %v478 = vld [vmem:[#allocation2 + $0xe0] sm:$0xff]
        %v479 = vld [vmem:[#allocation2 + $0xe8] sm:$0xff]
        %v480 = vld [vmem:[#allocation2 + $0xf0] sm:$0xff]
        %v481 = vld [vmem:[#allocation2 + $0xf8] sm:$0xff]
        %v482 = vld [vmem:[%s364] sm:$0xff]
        %v483 = vld [vmem:[%s364 + $0x8] sm:$0xff]
        %v484 = vld [vmem:[%s364 + $0x10] sm:$0xff]
        %v485 = vld [vmem:[%s364 + $0x18] sm:$0xff]
        %v486 = vld [vmem:[%s364 + $0x20] sm:$0xff]
        %v487 = vld [vmem:[%s364 + $0x28] sm:$0xff]
        %v488 = vld [vmem:[%s364 + $0x30] sm:$0xff]
        %v489 = vld [vmem:[%s364 + $0x38] sm:$0xff]
        %v490 = vld [vmem:[%s364 + $0x40] sm:$0xff]
        %v491 = vld [vmem:[%s364 + $0x48] sm:$0xff]
        %v492 = vld [vmem:[%s364 + $0x50] sm:$0xff]
        %v493 = vld [vmem:[%s364 + $0x58] sm:$0xff]
        %v494 = vld [vmem:[%s364 + $0x60] sm:$0xff]
        %v495 = vld [vmem:[%s364 + $0x68] sm:$0xff]
        %v496 = vld [vmem:[%s364 + $0x70] sm:$0xff]
        %v497 = vld [vmem:[%s364 + $0x78] sm:$0xff]
        %v498 = vld [vmem:[%s364 + $0x80] sm:$0xff]
        %v499 = vld [vmem:[%s364 + $0x88] sm:$0xff]
        %v500 = vld [vmem:[%s364 + $0x90] sm:$0xff]
        %v501 = vld [vmem:[%s364 + $0x98] sm:$0xff]
        %v502 = vld [vmem:[%s364 + $0xa0] sm:$0xff]
        %v503 = vld [vmem:[%s364 + $0xa8] sm:$0xff]
        %v504 = vld [vmem:[%s364 + $0xb0] sm:$0xff]
        %v505 = vld [vmem:[%s364 + $0xb8] sm:$0xff]
        %v506 = vld [vmem:[%s364 + $0xc0] sm:$0xff]
        %v507 = vld [vmem:[%s364 + $0xc8] sm:$0xff]
        %v508 = vld [vmem:[%s364 + $0xd0] sm:$0xff]
        %v509 = vld [vmem:[%s364 + $0xd8] sm:$0xff]
        %v510 = vld [vmem:[%s364 + $0xe0] sm:$0xff]
        %v511 = vld [vmem:[%s364 + $0xe8] sm:$0xff]
        %v512 = vld [vmem:[%s364 + $0xf0] sm:$0xff]
        %v513 = vld [vmem:[%s364 + $0xf8] sm:$0xff]
        %s514 = sshra.s32 %s449, 3
        %s515 = sand.u32 %s449, 7
        %s516 = smul.addr %s514, 4
        %s517 = scalar_lea.vmem %s1, %s516
        %v518 = vld [vmem:[%s517] sm:$0xf]
        %v519 = vld [vmem:[%s517 + $0x4] sm:$0xf]
        %v520 = vld [vmem:[%s517 + $0x8] sm:$0xf]
        %v521 = vld [vmem:[%s517 + $0xc] sm:$0xf]
        %v522 = vld [vmem:[%s517 + $0x10] sm:$0xf]
        %v523 = vld [vmem:[%s517 + $0x14] sm:$0xf]
        %v524 = vld [vmem:[%s517 + $0x18] sm:$0xf]
        %v525 = vld [vmem:[%s517 + $0x1c] sm:$0xf]
        %v526 = vld [vmem:[%s517 + $0x20] sm:$0xf]
        %v527 = vld [vmem:[%s517 + $0x24] sm:$0xf]
        %v528 = vld [vmem:[%s517 + $0x28] sm:$0xf]
        %v529 = vld [vmem:[%s517 + $0x2c] sm:$0xf]
        %v530 = vld [vmem:[%s517 + $0x30] sm:$0xf]
        %v531 = vld [vmem:[%s517 + $0x34] sm:$0xf]
        %v532 = vld [vmem:[%s517 + $0x38] sm:$0xf]
        %v533 = vld [vmem:[%s517 + $0x3c] sm:$0xf]
        %v534 = vld [vmem:[%s517 + $0x40] sm:$0xf]
        %v535 = vld [vmem:[%s517 + $0x44] sm:$0xf]
        %v536 = vld [vmem:[%s517 + $0x48] sm:$0xf]
        %v537 = vld [vmem:[%s517 + $0x4c] sm:$0xf]
        %v538 = vld [vmem:[%s517 + $0x50] sm:$0xf]
        %v539 = vld [vmem:[%s517 + $0x54] sm:$0xf]
        %v540 = vld [vmem:[%s517 + $0x58] sm:$0xf]
        %v541 = vld [vmem:[%s517 + $0x5c] sm:$0xf]
        %v542 = vld [vmem:[%s517 + $0x60] sm:$0xf]
        %v543 = vld [vmem:[%s517 + $0x64] sm:$0xf]
        %v544 = vld [vmem:[%s517 + $0x68] sm:$0xf]
        %v545 = vld [vmem:[%s517 + $0x6c] sm:$0xf]
        %v546 = vld [vmem:[%s517 + $0x70] sm:$0xf]
        %v547 = vld [vmem:[%s517 + $0x74] sm:$0xf]
        %v548 = vld [vmem:[%s517 + $0x78] sm:$0xf]
        %v549 = vld [vmem:[%s517 + $0x7c] sm:$0xf]
        %v582 = vunpack.c.l.b16 %v482
        %v583 = vunpack.c.h.b16 %v482
        %v584 = vunpack.c.l.b16 %v483
        %v585 = vunpack.c.h.b16 %v483
        %v586 = vunpack.c.l.b16 %v484
        %v587 = vunpack.c.h.b16 %v484
        %v588 = vunpack.c.l.b16 %v485
        %v589 = vunpack.c.h.b16 %v485
        %v590 = vunpack.c.l.b16 %v486
        %v591 = vunpack.c.h.b16 %v486
        %v592 = vunpack.c.l.b16 %v487
        %v593 = vunpack.c.h.b16 %v487
        %v594 = vunpack.c.l.b16 %v488
        %v595 = vunpack.c.h.b16 %v488
        %v596 = vunpack.c.l.b16 %v489
        %v597 = vunpack.c.h.b16 %v489
        %v598 = vunpack.c.l.b16 %v490
        %v599 = vunpack.c.h.b16 %v490
        %v600 = vunpack.c.l.b16 %v491
        %v601 = vunpack.c.h.b16 %v491
        %v602 = vunpack.c.l.b16 %v492
        %v603 = vunpack.c.h.b16 %v492
        %v604 = vunpack.c.l.b16 %v493
        %v605 = vunpack.c.h.b16 %v493
        %v606 = vunpack.c.l.b16 %v494
        %v607 = vunpack.c.h.b16 %v494
        %v608 = vunpack.c.l.b16 %v495
        %v609 = vunpack.c.h.b16 %v495
        %v610 = vunpack.c.l.b16 %v496
        %v611 = vunpack.c.h.b16 %v496
        %v612 = vunpack.c.l.b16 %v497
        %v613 = vunpack.c.h.b16 %v497
        %v614 = vunpack.c.l.b16 %v498
        %v615 = vunpack.c.h.b16 %v498
        %v616 = vunpack.c.l.b16 %v499
        %v617 = vunpack.c.h.b16 %v499
        %v618 = vunpack.c.l.b16 %v500
        %v619 = vunpack.c.h.b16 %v500
        %v620 = vunpack.c.l.b16 %v501
        %v621 = vunpack.c.h.b16 %v501
        %v622 = vunpack.c.l.b16 %v502
        %v623 = vunpack.c.h.b16 %v502
        %v624 = vunpack.c.l.b16 %v503
        %v625 = vunpack.c.h.b16 %v503
        %v626 = vunpack.c.l.b16 %v504
        %v627 = vunpack.c.h.b16 %v504
        %v628 = vunpack.c.l.b16 %v505
        %v629 = vunpack.c.h.b16 %v505
        %v630 = vunpack.c.l.b16 %v506
        %v631 = vunpack.c.h.b16 %v506
        %v632 = vunpack.c.l.b16 %v507
        %v633 = vunpack.c.h.b16 %v507
        %v634 = vunpack.c.l.b16 %v508
        %v635 = vunpack.c.h.b16 %v508
        %v636 = vunpack.c.l.b16 %v509
        %v637 = vunpack.c.h.b16 %v509
        %v638 = vunpack.c.l.b16 %v510
        %v639 = vunpack.c.h.b16 %v510
        %v640 = vunpack.c.l.b16 %v511
        %v641 = vunpack.c.h.b16 %v511
        %v642 = vunpack.c.l.b16 %v512
        %v643 = vunpack.c.h.b16 %v512
        %v644 = vunpack.c.l.b16 %v513
        %v645 = vunpack.c.h.b16 %v513
        %v646 = vpack.c.b16 %v584, %v582
        %v647 = vpack.c.b16 %v585, %v583
        %v648 = vpack.c.b16 %v588, %v586
        %v649 = vpack.c.b16 %v589, %v587
        %v650 = vpack.c.b16 %v592, %v590
        %v651 = vpack.c.b16 %v593, %v591
        %v652 = vpack.c.b16 %v596, %v594
        %v653 = vpack.c.b16 %v597, %v595
        %v654 = vpack.c.b16 %v600, %v598
        %v655 = vpack.c.b16 %v601, %v599
        %v656 = vpack.c.b16 %v604, %v602
        %v657 = vpack.c.b16 %v605, %v603
        %v658 = vpack.c.b16 %v608, %v606
        %v659 = vpack.c.b16 %v609, %v607
        %v660 = vpack.c.b16 %v612, %v610
        %v661 = vpack.c.b16 %v613, %v611
        %v662 = vpack.c.b16 %v616, %v614
        %v663 = vpack.c.b16 %v617, %v615
        %v664 = vpack.c.b16 %v620, %v618
        %v665 = vpack.c.b16 %v621, %v619
        %v666 = vpack.c.b16 %v624, %v622
        %v667 = vpack.c.b16 %v625, %v623
        %v668 = vpack.c.b16 %v628, %v626
        %v669 = vpack.c.b16 %v629, %v627
        %v670 = vpack.c.b16 %v632, %v630
        %v671 = vpack.c.b16 %v633, %v631
        %v672 = vpack.c.b16 %v636, %v634
        %v673 = vpack.c.b16 %v637, %v635
        %v674 = vpack.c.b16 %v640, %v638
        %v675 = vpack.c.b16 %v641, %v639
        %v676 = vpack.c.b16 %v644, %v642
        %v677 = vpack.c.b16 %v645, %v643
        %v742 = vunpack.c.l.b16 %v518
        %v743 = vunpack.c.l.b16 %v519
        %v744 = vunpack.c.l.b16 %v520
        %v745 = vunpack.c.l.b16 %v521
        %v746 = vunpack.c.l.b16 %v522
        %v747 = vunpack.c.l.b16 %v523
        %v748 = vunpack.c.l.b16 %v524
        %v749 = vunpack.c.l.b16 %v525
        %v750 = vunpack.c.l.b16 %v526
        %v751 = vunpack.c.l.b16 %v527
        %v752 = vunpack.c.l.b16 %v528
        %v753 = vunpack.c.l.b16 %v529
        %v754 = vunpack.c.l.b16 %v530
        %v755 = vunpack.c.l.b16 %v531
        %v756 = vunpack.c.l.b16 %v532
        %v757 = vunpack.c.l.b16 %v533
        %v758 = vunpack.c.l.b16 %v534
        %v759 = vunpack.c.l.b16 %v535
        %v760 = vunpack.c.l.b16 %v536
        %v761 = vunpack.c.l.b16 %v537
        %v762 = vunpack.c.l.b16 %v538
        %v763 = vunpack.c.l.b16 %v539
        %v764 = vunpack.c.l.b16 %v540
        %v765 = vunpack.c.l.b16 %v541
        %v766 = vunpack.c.l.b16 %v542
        %v767 = vunpack.c.l.b16 %v543
        %v768 = vunpack.c.l.b16 %v544
        %v769 = vunpack.c.l.b16 %v545
        %v770 = vunpack.c.l.b16 %v546
        %v771 = vunpack.c.l.b16 %v547
        %v772 = vunpack.c.l.b16 %v548
        %v773 = vunpack.c.l.b16 %v549
        %v774 = vpack.c.b16 %v743, %v742
        %v775 = vpack.c.b16 %v745, %v744
        %v776 = vpack.c.b16 %v747, %v746
        %v777 = vpack.c.b16 %v749, %v748
        %v778 = vpack.c.b16 %v751, %v750
        %v779 = vpack.c.b16 %v753, %v752
        %v780 = vpack.c.b16 %v755, %v754
        %v781 = vpack.c.b16 %v757, %v756
        %v782 = vpack.c.b16 %v759, %v758
        %v783 = vpack.c.b16 %v761, %v760
        %v784 = vpack.c.b16 %v763, %v762
        %v785 = vpack.c.b16 %v765, %v764
        %v786 = vpack.c.b16 %v767, %v766
        %v787 = vpack.c.b16 %v769, %v768
        %v788 = vpack.c.b16 %v771, %v770
        %v789 = vpack.c.b16 %v773, %v772
        %806 = vmatprep.subr.bf16.mxu0 0
        %807 = vmatpush1.bf16.msra.mxu0 %v781
        %808 = vmatprep.subr.bf16.mxu0 0
        %809 = vmatpush1.bf16.msra.mxu0 %v780
        %810 = vmatprep.subr.bf16.mxu0 0
        %811 = vmatpush1.bf16.msra.mxu0 %v779
        %812 = vmatprep.subr.bf16.mxu0 0
        %813 = vmatpush1.bf16.msra.mxu0 %v778
        %814 = vmatprep.subr.bf16.mxu0 0
        %815 = vmatpush1.bf16.msra.mxu0 %v777
        %816 = vmatprep.subr.bf16.mxu0 0
        %817 = vmatpush1.bf16.msra.mxu0 %v776
        %818 = vmatprep.subr.bf16.mxu0 0
        %819 = vmatpush1.bf16.msra.mxu0 %v775
        %820 = vmatprep.subr.bf16.mxu0 0
        %821 = vmatpush1.bf16.msra.mxu0 %v774
        %822 = vmatprep.subr.bf16.mxu0 0
        %823 = vmatpush2.bf16.msra.mxu0 %v789
        %824 = vmatprep.subr.bf16.mxu0 0
        %825 = vmatpush2.bf16.msra.mxu0 %v788
        %826 = vmatprep.subr.bf16.mxu0 0
        %827 = vmatpush2.bf16.msra.mxu0 %v787
        %828 = vmatprep.subr.bf16.mxu0 0
        %829 = vmatpush2.bf16.msra.mxu0 %v786
        %830 = vmatprep.subr.bf16.mxu0 0
        %831 = vmatpush2.bf16.msra.mxu0 %v785
        %832 = vmatprep.subr.bf16.mxu0 0
        %833 = vmatpush2.bf16.msra.mxu0 %v784
        %834 = vmatprep.subr.bf16.mxu0 0
        %835 = vmatpush2.bf16.msra.mxu0 %v783
        %836 = vmatprep.subr.bf16.mxu0 0
        %837 = vmatpush2.bf16.msra.mxu0 %v782
        %838 = vmatprep.mubr.bf16.mxu0 %v647
        %839 = vmatmul.mubr.bf16.gmra.mxu0 %v646
        %v840 = vpop.f32.mrf.mxu0
        %v841 = vadd.f32 0.0, %v840
        %v842 = vpop.f32.mrf.mxu0
        %v843 = vpop.f32.mrf.mxu0
        %v844 = vadd.f32 0.0, %v843
        %v845 = vpop.f32.mrf.mxu0
        %846 = vmatprep.mubr.bf16.mxu0 %v649
        %847 = vmatmul.mubr.bf16.gmra.mxu0 %v648
        %v848 = vpop.f32.mrf.mxu0
        %v849 = vadd.f32 0.0, %v848
        %v850 = vpop.f32.mrf.mxu0
        %v851 = vpop.f32.mrf.mxu0
        %v852 = vadd.f32 0.0, %v851
        %v853 = vpop.f32.mrf.mxu0
        %854 = vmatprep.mubr.bf16.mxu0 %v651
        %855 = vmatmul.mubr.bf16.gmra.mxu0 %v650
        %v856 = vpop.f32.mrf.mxu0
        %v857 = vadd.f32 0.0, %v856
        %v858 = vpop.f32.mrf.mxu0
        %v859 = vpop.f32.mrf.mxu0
        %v860 = vadd.f32 0.0, %v859
        %v861 = vpop.f32.mrf.mxu0
        %862 = vmatprep.mubr.bf16.mxu0 %v653
        %863 = vmatmul.mubr.bf16.gmra.mxu0 %v652
        %v864 = vpop.f32.mrf.mxu0
        %v865 = vadd.f32 0.0, %v864
        %v866 = vpop.f32.mrf.mxu0
        %v867 = vpop.f32.mrf.mxu0
        %v868 = vadd.f32 0.0, %v867
        %v869 = vpop.f32.mrf.mxu0
        %870 = vmatprep.mubr.bf16.mxu0 %v655
        %871 = vmatmul.mubr.bf16.gmra.mxu0 %v654
        %v872 = vpop.f32.mrf.mxu0
        %v873 = vadd.f32 0.0, %v872
        %v874 = vpop.f32.mrf.mxu0
        %v875 = vpop.f32.mrf.mxu0
        %v876 = vadd.f32 0.0, %v875
        %v877 = vpop.f32.mrf.mxu0
        %878 = vmatprep.mubr.bf16.mxu0 %v657
        %879 = vmatmul.mubr.bf16.gmra.mxu0 %v656
        %v880 = vpop.f32.mrf.mxu0
        %v881 = vadd.f32 0.0, %v880
        %v882 = vpop.f32.mrf.mxu0
        %v883 = vpop.f32.mrf.mxu0
        %v884 = vadd.f32 0.0, %v883
        %v885 = vpop.f32.mrf.mxu0
        %886 = vmatprep.mubr.bf16.mxu0 %v659
        %887 = vmatmul.mubr.bf16.gmra.mxu0 %v658
        %v888 = vpop.f32.mrf.mxu0
        %v889 = vadd.f32 0.0, %v888
        %v890 = vpop.f32.mrf.mxu0
        %v891 = vpop.f32.mrf.mxu0
        %v892 = vadd.f32 0.0, %v891
        %v893 = vpop.f32.mrf.mxu0
        %894 = vmatprep.mubr.bf16.mxu0 %v661
        %895 = vmatmul.mubr.bf16.gmra.mxu0 %v660
        %v896 = vpop.f32.mrf.mxu0
        %v897 = vadd.f32 0.0, %v896
        %v898 = vpop.f32.mrf.mxu0
        %v899 = vpop.f32.mrf.mxu0
        %v900 = vadd.f32 0.0, %v899
        %v901 = vpop.f32.mrf.mxu0
        %902 = vmatprep.mubr.bf16.mxu0 %v663
        %903 = vmatmul.mubr.bf16.gmra.mxu0 %v662
        %v904 = vpop.f32.mrf.mxu0
        %v905 = vadd.f32 0.0, %v904
        %v906 = vpop.f32.mrf.mxu0
        %v907 = vpop.f32.mrf.mxu0
        %v908 = vadd.f32 0.0, %v907
        %v909 = vpop.f32.mrf.mxu0
        %910 = vmatprep.mubr.bf16.mxu0 %v665
        %911 = vmatmul.mubr.bf16.gmra.mxu0 %v664
        %v912 = vpop.f32.mrf.mxu0
        %v913 = vadd.f32 0.0, %v912
        %v914 = vpop.f32.mrf.mxu0
        %v915 = vpop.f32.mrf.mxu0
        %v916 = vadd.f32 0.0, %v915
        %v917 = vpop.f32.mrf.mxu0
        %918 = vmatprep.mubr.bf16.mxu0 %v667
        %919 = vmatmul.mubr.bf16.gmra.mxu0 %v666
        %v920 = vpop.f32.mrf.mxu0
        %v921 = vadd.f32 0.0, %v920
        %v922 = vpop.f32.mrf.mxu0
        %v923 = vpop.f32.mrf.mxu0
        %v924 = vadd.f32 0.0, %v923
        %v925 = vpop.f32.mrf.mxu0
        %926 = vmatprep.mubr.bf16.mxu0 %v669
        %927 = vmatmul.mubr.bf16.gmra.mxu0 %v668
        %v928 = vpop.f32.mrf.mxu0
        %v929 = vadd.f32 0.0, %v928
        %v930 = vpop.f32.mrf.mxu0
        %v931 = vpop.f32.mrf.mxu0
        %v932 = vadd.f32 0.0, %v931
        %v933 = vpop.f32.mrf.mxu0
        %934 = vmatprep.mubr.bf16.mxu0 %v671
        %935 = vmatmul.mubr.bf16.gmra.mxu0 %v670
        %v936 = vpop.f32.mrf.mxu0
        %v937 = vadd.f32 0.0, %v936
        %v938 = vpop.f32.mrf.mxu0
        %v939 = vpop.f32.mrf.mxu0
        %v940 = vadd.f32 0.0, %v939
        %v941 = vpop.f32.mrf.mxu0
        %942 = vmatprep.mubr.bf16.mxu0 %v673
        %943 = vmatmul.mubr.bf16.gmra.mxu0 %v672
        %v944 = vpop.f32.mrf.mxu0
        %v945 = vadd.f32 0.0, %v944
        %v946 = vpop.f32.mrf.mxu0
        %v947 = vpop.f32.mrf.mxu0
        %v948 = vadd.f32 0.0, %v947
        %v949 = vpop.f32.mrf.mxu0
        %950 = vmatprep.mubr.bf16.mxu0 %v675
        %951 = vmatmul.mubr.bf16.gmra.mxu0 %v674
        %v952 = vpop.f32.mrf.mxu0
        %v953 = vadd.f32 0.0, %v952
        %v954 = vpop.f32.mrf.mxu0
        %v955 = vpop.f32.mrf.mxu0
        %v956 = vadd.f32 0.0, %v955
        %v957 = vpop.f32.mrf.mxu0
        %958 = vmatprep.mubr.bf16.mxu0 %v677
        %959 = vmatmul.mubr.bf16.gmra.mxu0 %v676
        %v960 = vpop.f32.mrf.mxu0
        %v961 = vadd.f32 0.0, %v960
        %v962 = vpop.f32.mrf.mxu0
        %v963 = vpop.f32.mrf.mxu0
        %v964 = vadd.f32 0.0, %v963
        %v965 = vpop.f32.mrf.mxu0
        %966 = vdwg.mxu0
        %v967 = vadd.f32 %v450, %v841
        %v968 = vadd.f32 %v451, %v844
        %v969 = vadd.f32 %v452, %v849
        %v970 = vadd.f32 %v453, %v852
        %v971 = vadd.f32 %v454, %v857
        %v972 = vadd.f32 %v455, %v860
        %v973 = vadd.f32 %v456, %v865
        %v974 = vadd.f32 %v457, %v868
        %v975 = vadd.f32 %v458, %v873
        %v976 = vadd.f32 %v459, %v876
        %v977 = vadd.f32 %v460, %v881
        %v978 = vadd.f32 %v461, %v884
        %v979 = vadd.f32 %v462, %v889
        %v980 = vadd.f32 %v463, %v892
        %v981 = vadd.f32 %v464, %v897
        %v982 = vadd.f32 %v465, %v900
        %v983 = vadd.f32 %v466, %v905
        %v984 = vadd.f32 %v467, %v908
        %v985 = vadd.f32 %v468, %v913
        %v986 = vadd.f32 %v469, %v916
        %v987 = vadd.f32 %v470, %v921
        %v988 = vadd.f32 %v471, %v924
        %v989 = vadd.f32 %v472, %v929
        %v990 = vadd.f32 %v473, %v932
        %v991 = vadd.f32 %v474, %v937
        %v992 = vadd.f32 %v475, %v940
        %v993 = vadd.f32 %v476, %v945
        %v994 = vadd.f32 %v477, %v948
        %v995 = vadd.f32 %v478, %v953
        %v996 = vadd.f32 %v479, %v956
        %v997 = vadd.f32 %v480, %v961
        %v998 = vadd.f32 %v481, %v964
        %999 = vst [vmem:[#allocation2] sm:$0xff] %v967
        %1000 = vst [vmem:[#allocation2 + $0x8] sm:$0xff] %v968
        %1001 = vst [vmem:[#allocation2 + $0x10] sm:$0xff] %v969
        %1002 = vst [vmem:[#allocation2 + $0x18] sm:$0xff] %v970
        %1003 = vst [vmem:[#allocation2 + $0x20] sm:$0xff] %v971
        %1004 = vst [vmem:[#allocation2 + $0x28] sm:$0xff] %v972
        %1005 = vst [vmem:[#allocation2 + $0x30] sm:$0xff] %v973
        %1006 = vst [vmem:[#allocation2 + $0x38] sm:$0xff] %v974
        %1007 = vst [vmem:[#allocation2 + $0x40] sm:$0xff] %v975
        %1008 = vst [vmem:[#allocation2 + $0x48] sm:$0xff] %v976
        %1009 = vst [vmem:[#allocation2 + $0x50] sm:$0xff] %v977
        %1010 = vst [vmem:[#allocation2 + $0x58] sm:$0xff] %v978
        %1011 = vst [vmem:[#allocation2 + $0x60] sm:$0xff] %v979
        %1012 = vst [vmem:[#allocation2 + $0x68] sm:$0xff] %v980
        %1013 = vst [vmem:[#allocation2 + $0x70] sm:$0xff] %v981
        %1014 = vst [vmem:[#allocation2 + $0x78] sm:$0xff] %v982
        %1015 = vst [vmem:[#allocation2 + $0x80] sm:$0xff] %v983
        %1016 = vst [vmem:[#allocation2 + $0x88] sm:$0xff] %v984
        %1017 = vst [vmem:[#allocation2 + $0x90] sm:$0xff] %v985
        %1018 = vst [vmem:[#allocation2 + $0x98] sm:$0xff] %v986
        %1019 = vst [vmem:[#allocation2 + $0xa0] sm:$0xff] %v987
        %1020 = vst [vmem:[#allocation2 + $0xa8] sm:$0xff] %v988
        %1021 = vst [vmem:[#allocation2 + $0xb0] sm:$0xff] %v989
        %1022 = vst [vmem:[#allocation2 + $0xb8] sm:$0xff] %v990
        %1023 = vst [vmem:[#allocation2 + $0xc0] sm:$0xff] %v991
        %1024 = vst [vmem:[#allocation2 + $0xc8] sm:$0xff] %v992
        %1025 = vst [vmem:[#allocation2 + $0xd0] sm:$0xff] %v993
        %1026 = vst [vmem:[#allocation2 + $0xd8] sm:$0xff] %v994
        %1027 = vst [vmem:[#allocation2 + $0xe0] sm:$0xff] %v995
        %1028 = vst [vmem:[#allocation2 + $0xe8] sm:$0xff] %v996
        %1029 = vst [vmem:[#allocation2 + $0xf0] sm:$0xff] %v997
        %1030 = vst [vmem:[#allocation2 + $0xf8] sm:$0xff] %v998
        %p1031 = scmp.eq.s32.totalorder %s24, 1
        // Predicated region
        $region75: #{llard_forward.3} parent=65 // pred_check
          %p1032 = pneg %p1031
        $region76: #{llard_forward.3} parent=65 // pred_check_branch
          %1034 = sbr.rel (%p1032) target = $region78
        $region77: #{llard_forward.3} parent=65 // pred_region
          %v1035 = vld [vmem:[#allocation2] sm:$0xff]
          %v1036 = vld [vmem:[#allocation2 + $0x8] sm:$0xff]
          %v1037 = vld [vmem:[#allocation2 + $0x10] sm:$0xff]
          %v1038 = vld [vmem:[#allocation2 + $0x18] sm:$0xff]
          %v1039 = vld [vmem:[#allocation2 + $0x20] sm:$0xff]
          %v1040 = vld [vmem:[#allocation2 + $0x28] sm:$0xff]
          %v1041 = vld [vmem:[#allocation2 + $0x30] sm:$0xff]
          %v1042 = vld [vmem:[#allocation2 + $0x38] sm:$0xff]
          %v1043 = vld [vmem:[#allocation2 + $0x40] sm:$0xff]
          %v1044 = vld [vmem:[#allocation2 + $0x48] sm:$0xff]
          %v1045 = vld [vmem:[#allocation2 + $0x50] sm:$0xff]
          %v1046 = vld [vmem:[#allocation2 + $0x58] sm:$0xff]
          %v1047 = vld [vmem:[#allocation2 + $0x60] sm:$0xff]
          %v1048 = vld [vmem:[#allocation2 + $0x68] sm:$0xff]
          %v1049 = vld [vmem:[#allocation2 + $0x70] sm:$0xff]
          %v1050 = vld [vmem:[#allocation2 + $0x78] sm:$0xff]
          %v1051 = vld [vmem:[#allocation2 + $0x80] sm:$0xff]
          %v1052 = vld [vmem:[#allocation2 + $0x88] sm:$0xff]
          %v1053 = vld [vmem:[#allocation2 + $0x90] sm:$0xff]
          %v1054 = vld [vmem:[#allocation2 + $0x98] sm:$0xff]
          %v1055 = vld [vmem:[#allocation2 + $0xa0] sm:$0xff]
          %v1056 = vld [vmem:[#allocation2 + $0xa8] sm:$0xff]
          %v1057 = vld [vmem:[#allocation2 + $0xb0] sm:$0xff]
          %v1058 = vld [vmem:[#allocation2 + $0xb8] sm:$0xff]
          %v1059 = vld [vmem:[#allocation2 + $0xc0] sm:$0xff]
          %v1060 = vld [vmem:[#allocation2 + $0xc8] sm:$0xff]
          %v1061 = vld [vmem:[#allocation2 + $0xd0] sm:$0xff]
          %v1062 = vld [vmem:[#allocation2 + $0xd8] sm:$0xff]
          %v1063 = vld [vmem:[#allocation2 + $0xe0] sm:$0xff]
          %v1064 = vld [vmem:[#allocation2 + $0xe8] sm:$0xff]
          %v1065 = vld [vmem:[#allocation2 + $0xf0] sm:$0xff]
          %v1066 = vld [vmem:[#allocation2 + $0xf8] sm:$0xff]
          %v1067 = vld [vmem:[%s403] sm:$0xff]
          %v1068 = vld [vmem:[%s403 + $0x8] sm:$0xff]
          %v1069 = vld [vmem:[%s403 + $0x10] sm:$0xff]
          %v1070 = vld [vmem:[%s403 + $0x18] sm:$0xff]
          %v1071 = vld [vmem:[%s403 + $0x20] sm:$0xff]
          %v1072 = vld [vmem:[%s403 + $0x28] sm:$0xff]
          %v1073 = vld [vmem:[%s403 + $0x30] sm:$0xff]
          %v1074 = vld [vmem:[%s403 + $0x38] sm:$0xff]
          %v1075 = vld [vmem:[%s403 + $0x40] sm:$0xff]
          %v1076 = vld [vmem:[%s403 + $0x48] sm:$0xff]
          %v1077 = vld [vmem:[%s403 + $0x50] sm:$0xff]
          %v1078 = vld [vmem:[%s403 + $0x58] sm:$0xff]
          %v1079 = vld [vmem:[%s403 + $0x60] sm:$0xff]
          %v1080 = vld [vmem:[%s403 + $0x68] sm:$0xff]
          %v1081 = vld [vmem:[%s403 + $0x70] sm:$0xff]
          %v1082 = vld [vmem:[%s403 + $0x78] sm:$0xff]
          %v1083 = vld [vmem:[%s403 + $0x80] sm:$0xff]
          %v1084 = vld [vmem:[%s403 + $0x88] sm:$0xff]
          %v1085 = vld [vmem:[%s403 + $0x90] sm:$0xff]
          %v1086 = vld [vmem:[%s403 + $0x98] sm:$0xff]
          %v1087 = vld [vmem:[%s403 + $0xa0] sm:$0xff]
          %v1088 = vld [vmem:[%s403 + $0xa8] sm:$0xff]
          %v1089 = vld [vmem:[%s403 + $0xb0] sm:$0xff]
          %v1090 = vld [vmem:[%s403 + $0xb8] sm:$0xff]
          %v1091 = vld [vmem:[%s403 + $0xc0] sm:$0xff]
          %v1092 = vld [vmem:[%s403 + $0xc8] sm:$0xff]
          %v1093 = vld [vmem:[%s403 + $0xd0] sm:$0xff]
          %v1094 = vld [vmem:[%s403 + $0xd8] sm:$0xff]
          %v1095 = vld [vmem:[%s403 + $0xe0] sm:$0xff]
          %v1096 = vld [vmem:[%s403 + $0xe8] sm:$0xff]
          %v1097 = vld [vmem:[%s403 + $0xf0] sm:$0xff]
          %v1098 = vld [vmem:[%s403 + $0xf8] sm:$0xff]
          %v1099 = vadd.f32 %v1067, %v1035
          %v1100 = vadd.f32 %v1068, %v1036
          %v1101 = vadd.f32 %v1069, %v1037
          %v1102 = vadd.f32 %v1070, %v1038
          %v1103 = vadd.f32 %v1071, %v1039
          %v1104 = vadd.f32 %v1072, %v1040
          %v1105 = vadd.f32 %v1073, %v1041
          %v1106 = vadd.f32 %v1074, %v1042
          %v1107 = vadd.f32 %v1075, %v1043
          %v1108 = vadd.f32 %v1076, %v1044
          %v1109 = vadd.f32 %v1077, %v1045
          %v1110 = vadd.f32 %v1078, %v1046
          %v1111 = vadd.f32 %v1079, %v1047
          %v1112 = vadd.f32 %v1080, %v1048
          %v1113 = vadd.f32 %v1081, %v1049
          %v1114 = vadd.f32 %v1082, %v1050
          %v1115 = vadd.f32 %v1083, %v1051
          %v1116 = vadd.f32 %v1084, %v1052
          %v1117 = vadd.f32 %v1085, %v1053
          %v1118 = vadd.f32 %v1086, %v1054
          %v1119 = vadd.f32 %v1087, %v1055
          %v1120 = vadd.f32 %v1088, %v1056
          %v1121 = vadd.f32 %v1089, %v1057
          %v1122 = vadd.f32 %v1090, %v1058
          %v1123 = vadd.f32 %v1091, %v1059
          %v1124 = vadd.f32 %v1092, %v1060
          %v1125 = vadd.f32 %v1093, %v1061
          %v1126 = vadd.f32 %v1094, %v1062
          %v1127 = vadd.f32 %v1095, %v1063
          %v1128 = vadd.f32 %v1096, %v1064
          %v1129 = vadd.f32 %v1097, %v1065
          %v1130 = vadd.f32 %v1098, %v1066
          %1131 = vst [vmem:[%s409] sm:$0xff] %v1099
          %1132 = vst [vmem:[%s409 + $0x8] sm:$0xff] %v1100
          %1133 = vst [vmem:[%s409 + $0x10] sm:$0xff] %v1101
          %1134 = vst [vmem:[%s409 + $0x18] sm:$0xff] %v1102
          %1135 = vst [vmem:[%s409 + $0x20] sm:$0xff] %v1103
          %1136 = vst [vmem:[%s409 + $0x28] sm:$0xff] %v1104
          %1137 = vst [vmem:[%s409 + $0x30] sm:$0xff] %v1105
          %1138 = vst [vmem:[%s409 + $0x38] sm:$0xff] %v1106
          %1139 = vst [vmem:[%s409 + $0x40] sm:$0xff] %v1107
          %1140 = vst [vmem:[%s409 + $0x48] sm:$0xff] %v1108
          %1141 = vst [vmem:[%s409 + $0x50] sm:$0xff] %v1109
          %1142 = vst [vmem:[%s409 + $0x58] sm:$0xff] %v1110
          %1143 = vst [vmem:[%s409 + $0x60] sm:$0xff] %v1111
          %1144 = vst [vmem:[%s409 + $0x68] sm:$0xff] %v1112
          %1145 = vst [vmem:[%s409 + $0x70] sm:$0xff] %v1113
          %1146 = vst [vmem:[%s409 + $0x78] sm:$0xff] %v1114
          %1147 = vst [vmem:[%s409 + $0x80] sm:$0xff] %v1115
          %1148 = vst [vmem:[%s409 + $0x88] sm:$0xff] %v1116
          %1149 = vst [vmem:[%s409 + $0x90] sm:$0xff] %v1117
          %1150 = vst [vmem:[%s409 + $0x98] sm:$0xff] %v1118
          %1151 = vst [vmem:[%s409 + $0xa0] sm:$0xff] %v1119
          %1152 = vst [vmem:[%s409 + $0xa8] sm:$0xff] %v1120
          %1153 = vst [vmem:[%s409 + $0xb0] sm:$0xff] %v1121
          %1154 = vst [vmem:[%s409 + $0xb8] sm:$0xff] %v1122
          %1155 = vst [vmem:[%s409 + $0xc0] sm:$0xff] %v1123
          %1156 = vst [vmem:[%s409 + $0xc8] sm:$0xff] %v1124
          %1157 = vst [vmem:[%s409 + $0xd0] sm:$0xff] %v1125
          %1158 = vst [vmem:[%s409 + $0xd8] sm:$0xff] %v1126
          %1159 = vst [vmem:[%s409 + $0xe0] sm:$0xff] %v1127
          %1160 = vst [vmem:[%s409 + $0xe8] sm:$0xff] %v1128
          %1161 = vst [vmem:[%s409 + $0xf0] sm:$0xff] %v1129
          %1162 = vst [vmem:[%s409 + $0xf8] sm:$0xff] %v1130
          %v1163 = vpack.c.bf16 %v1036, %v1035
          %v1164 = vpack.c.bf16 %v1038, %v1037
          %v1165 = vpack.c.bf16 %v1040, %v1039
          %v1166 = vpack.c.bf16 %v1042, %v1041
          %v1167 = vpack.c.bf16 %v1044, %v1043
          %v1168 = vpack.c.bf16 %v1046, %v1045
          %v1169 = vpack.c.bf16 %v1048, %v1047
          %v1170 = vpack.c.bf16 %v1050, %v1049
          %v1171 = vpack.c.bf16 %v1052, %v1051
          %v1172 = vpack.c.bf16 %v1054, %v1053
          %v1173 = vpack.c.bf16 %v1056, %v1055
          %v1174 = vpack.c.bf16 %v1058, %v1057
          %v1175 = vpack.c.bf16 %v1060, %v1059
          %v1176 = vpack.c.bf16 %v1062, %v1061
          %v1177 = vpack.c.bf16 %v1064, %v1063
          %v1178 = vpack.c.bf16 %v1066, %v1065
          %v1195 = vunpack.c.l.b16 %v1163
          %v1196 = vunpack.c.h.b16 %v1163
          %v1197 = vunpack.c.l.b16 %v1164
          %v1198 = vunpack.c.h.b16 %v1164
          %v1199 = vunpack.c.l.b16 %v1165
          %v1200 = vunpack.c.h.b16 %v1165
          %v1201 = vunpack.c.l.b16 %v1166
          %v1202 = vunpack.c.h.b16 %v1166
          %v1203 = vunpack.c.l.b16 %v1167
          %v1204 = vunpack.c.h.b16 %v1167
          %v1205 = vunpack.c.l.b16 %v1168
          %v1206 = vunpack.c.h.b16 %v1168
          %v1207 = vunpack.c.l.b16 %v1169
          %v1208 = vunpack.c.h.b16 %v1169
          %v1209 = vunpack.c.l.b16 %v1170
          %v1210 = vunpack.c.h.b16 %v1170
          %v1211 = vunpack.c.l.b16 %v1171
          %v1212 = vunpack.c.h.b16 %v1171
          %v1213 = vunpack.c.l.b16 %v1172
          %v1214 = vunpack.c.h.b16 %v1172
          %v1215 = vunpack.c.l.b16 %v1173
          %v1216 = vunpack.c.h.b16 %v1173
          %v1217 = vunpack.c.l.b16 %v1174
          %v1218 = vunpack.c.h.b16 %v1174
          %v1219 = vunpack.c.l.b16 %v1175
          %v1220 = vunpack.c.h.b16 %v1175
          %v1221 = vunpack.c.l.b16 %v1176
          %v1222 = vunpack.c.h.b16 %v1176
          %v1223 = vunpack.c.l.b16 %v1177
          %v1224 = vunpack.c.h.b16 %v1177
          %v1225 = vunpack.c.l.b16 %v1178
          %v1226 = vunpack.c.h.b16 %v1178
          %v1227 = vpack.c.b16 %v1195, %v1195
          %v1228 = vpack.c.b16 %v1196, %v1196
          %v1229 = vpack.c.b16 %v1197, %v1197
          %v1230 = vpack.c.b16 %v1198, %v1198
          %v1231 = vpack.c.b16 %v1199, %v1199
          %v1232 = vpack.c.b16 %v1200, %v1200
          %v1233 = vpack.c.b16 %v1201, %v1201
          %v1234 = vpack.c.b16 %v1202, %v1202
          %v1235 = vpack.c.b16 %v1203, %v1203
          %v1236 = vpack.c.b16 %v1204, %v1204
          %v1237 = vpack.c.b16 %v1205, %v1205
          %v1238 = vpack.c.b16 %v1206, %v1206
          %v1239 = vpack.c.b16 %v1207, %v1207
          %v1240 = vpack.c.b16 %v1208, %v1208
          %v1241 = vpack.c.b16 %v1209, %v1209
          %v1242 = vpack.c.b16 %v1210, %v1210
          %v1243 = vpack.c.b16 %v1211, %v1211
          %v1244 = vpack.c.b16 %v1212, %v1212
          %v1245 = vpack.c.b16 %v1213, %v1213
          %v1246 = vpack.c.b16 %v1214, %v1214
          %v1247 = vpack.c.b16 %v1215, %v1215
          %v1248 = vpack.c.b16 %v1216, %v1216
          %v1249 = vpack.c.b16 %v1217, %v1217
          %v1250 = vpack.c.b16 %v1218, %v1218
          %v1251 = vpack.c.b16 %v1219, %v1219
          %v1252 = vpack.c.b16 %v1220, %v1220
          %v1253 = vpack.c.b16 %v1221, %v1221
          %v1254 = vpack.c.b16 %v1222, %v1222
          %v1255 = vpack.c.b16 %v1223, %v1223
          %v1256 = vpack.c.b16 %v1224, %v1224
          %v1257 = vpack.c.b16 %v1225, %v1225
          %v1258 = vpack.c.b16 %v1226, %v1226
          %1291 = vst [vmem:[%s396] sm:$0xf] %v1227
          %1292 = vst [vmem:[%s396 + $0x4] sm:$0xf] %v1228
          %1293 = vst [vmem:[%s396 + $0x8] sm:$0xf] %v1229
          %1294 = vst [vmem:[%s396 + $0xc] sm:$0xf] %v1230
          %1295 = vst [vmem:[%s396 + $0x10] sm:$0xf] %v1231
          %1296 = vst [vmem:[%s396 + $0x14] sm:$0xf] %v1232
          %1297 = vst [vmem:[%s396 + $0x18] sm:$0xf] %v1233
          %1298 = vst [vmem:[%s396 + $0x1c] sm:$0xf] %v1234
          %1299 = vst [vmem:[%s396 + $0x20] sm:$0xf] %v1235
          %1300 = vst [vmem:[%s396 + $0x24] sm:$0xf] %v1236
          %1301 = vst [vmem:[%s396 + $0x28] sm:$0xf] %v1237
          %1302 = vst [vmem:[%s396 + $0x2c] sm:$0xf] %v1238
          %1303 = vst [vmem:[%s396 + $0x30] sm:$0xf] %v1239
          %1304 = vst [vmem:[%s396 + $0x34] sm:$0xf] %v1240
          %1305 = vst [vmem:[%s396 + $0x38] sm:$0xf] %v1241
          %1306 = vst [vmem:[%s396 + $0x3c] sm:$0xf] %v1242
          %1307 = vst [vmem:[%s396 + $0x40] sm:$0xf] %v1243
          %1308 = vst [vmem:[%s396 + $0x44] sm:$0xf] %v1244
          %1309 = vst [vmem:[%s396 + $0x48] sm:$0xf] %v1245
          %1310 = vst [vmem:[%s396 + $0x4c] sm:$0xf] %v1246
          %1311 = vst [vmem:[%s396 + $0x50] sm:$0xf] %v1247
          %1312 = vst [vmem:[%s396 + $0x54] sm:$0xf] %v1248
          %1313 = vst [vmem:[%s396 + $0x58] sm:$0xf] %v1249
          %1314 = vst [vmem:[%s396 + $0x5c] sm:$0xf] %v1250
          %1315 = vst [vmem:[%s396 + $0x60] sm:$0xf] %v1251
          %1316 = vst [vmem:[%s396 + $0x64] sm:$0xf] %v1252
          %1317 = vst [vmem:[%s396 + $0x68] sm:$0xf] %v1253
          %1318 = vst [vmem:[%s396 + $0x6c] sm:$0xf] %v1254
          %1319 = vst [vmem:[%s396 + $0x70] sm:$0xf] %v1255
          %1320 = vst [vmem:[%s396 + $0x74] sm:$0xf] %v1256
          %1321 = vst [vmem:[%s396 + $0x78] sm:$0xf] %v1257
          %1322 = vst [vmem:[%s396 + $0x7c] sm:$0xf] %v1258
        $region78: #{llard_forward.3} parent=65 // pred_fallthru
          _
        %s1323 = smul.u32 32, %s23
        %p1324 = scmp.lt.s32.totalorder %s1323, 63
        %s1325 = scalar_select %p1324, %s1323, 63
        %s1326 = smul.addr %s1325, 8
        %s1327 = scalar_lea.vmem %s3, %s1326
        %s1328 = sand.u32 %s140, 1
        %s1329 = scalar_lea.sflag [#allocation5], %s1328
        %s1330 = sand.u32 %s140, 1
        %s1331 = smul.addr %s1330, 128
        %s1332 = scalar_lea.vmem [#allocation4], %s1331
        // Predicated region
        $region79: #{llard_forward.3} parent=65 // pred_check
          %p1333 = pneg %p124
        $region80: #{llard_forward.3} parent=65 // pred_check_branch
          %1335 = sbr.rel (%p1333) target = $region82
        $region81: #{llard_forward.3} parent=65 // pred_region
          %s1336 = smul.u32 32, %s23
        $region82: #{llard_forward.3} parent=65 // pred_fallthru
          _
        // Predicated region
        $region83: #{llard_forward.3} parent=65 // pred_check
          %p1337 = pneg %p150
        $region84: #{llard_forward.3} parent=65 // pred_check_branch
          %1339 = sbr.rel (%p1337) target = $region86
        $region85: #{llard_forward.3} parent=65 // pred_region
          %s1340 = smul.u32 32, %s23
          %s1342 = ssub.s32 2048, 2048
          %1343 = vsyncadd %s1329, %s1342
          %s1344 = smul.addr %s1340, 64
          %s1345 = scalar_lea.hbm %s4, %s1344
          %s1346 = sshll.u32 %s1332, 4
          %s1347 = int_to_ptr.vmem [resolvable:$true] %s1346
          %1352 = dma.vmem_to_hbm [thread:$0]  %s1347, 2048, %s1345, %s1329, 64, 64, 4
        $region86: #{llard_forward.3} parent=65 // pred_fallthru
          _
      $region66: #{llard_forward.3} parent=5 // pred_fallthru
        _
      %p1353 = scmp.le.s32.totalorder 2, %s14
      // Predicated region
      $region87: #{llard_forward.3} parent=5 // pred_check
        %p1354 = pneg %p1353
      $region88: #{llard_forward.3} parent=5 // pred_check_branch
        %1356 = sbr.rel (%p1354) target = $region90
      $region89: #{llard_forward.3} parent=5 // pred_region
        %s1357 = ssub.s32 %s14, 2
        // Predicated region
        $region91: #{llard_forward.3} parent=89 // pred_check
          %p1358 = pneg %p130
        $region92: #{llard_forward.3} parent=89 // pred_check_branch
          %1360 = sbr.rel (%p1358) target = $region94
        $region93: #{llard_forward.3} parent=89 // pred_region
          %s1361 = smul.u32 32, %s25
          %p1362 = scmp.lt.s32.totalorder %s1361, 63
          %s1363 = scalar_select %p1362, %s1361, 63
          %s1364 = smul.addr %s1363, 8
          %s1365 = scalar_lea.vmem %s3, %s1364
        $region94: #{llard_forward.3} parent=89 // pred_fallthru
          _
        // Predicated region
        $region95: #{llard_forward.3} parent=89 // pred_check
          %p1366 = pneg %p156
        $region96: #{llard_forward.3} parent=89 // pred_check_branch
          %1368 = sbr.rel (%p1366) target = $region98
        $region97: #{llard_forward.3} parent=89 // pred_region
          %s1369 = sand.u32 %s141, 1
          %s1370 = scalar_lea.sflag [#allocation5], %s1369
          %s1371 = sand.u32 %s141, 1
          %s1372 = smul.addr %s1371, 128
          %s1373 = scalar_lea.vmem [#allocation4], %s1372
          %1374 = dma.done %s1370, 2048
        $region98: #{llard_forward.3} parent=89 // pred_fallthru
          _
      $region90: #{llard_forward.3} parent=5 // pred_fallthru
        _
    $region6: #{llard_forward.3} parent=1 // loop_footer
      %s18 = sadd.s32 1, %s14
    $region7: #{llard_forward.3} parent=1 // loop_footer_branch
      %13 = sbr.rel target = $region3
    $region8: #{llard_forward.3} parent=1 // loop_exit
      _
    %1375 = vsyncpa [#allocation5], 1
    %s1376 = scalar_lea.sflag [#allocation5], 1
    %1377 = vsyncpa %s1376, 1

// kernel: llard_forward.2
$region0: #{llard_forward.2}
  #allocation0 [shape = 'u32[]', space=smem, size = 0x4, offset = 0x4, fixed_abs, tag = 'smem constant byte address 0x4 - core index']
  #allocation1 [shape = 'u32[144,128]{1,0:T(1,128)}', space=vmem, size = 0x12000, scoped, tag = 'internal scratch']
  #allocation2 [shape = 'f32[256,128]{1,0:T(8,128)}', space=vmem, size = 0x20000, scoped, tag = 'scratch operand']
  %s0 = inlined_call_operand.vmem [shape: bf16[512,512], index: 0, kind: input, shape index: {}]
  %s1 = inlined_call_operand.vmem [shape: bf16[512,128], index: 1, kind: input, shape index: {}]
  %s2 = inlined_call_operand.vmem [shape: f32[512,128], index: 2, kind: input, shape index: {}, may-alias: {2,3}]
  %s3 = inlined_call_operand.vmem [shape: f32[512,128], index: 3, kind: output, shape index: {0}, may-alias: {2,3}]
  %s4 = inlined_call_operand.vmem [shape: bf16[512,128], index: 4, kind: output, shape index: {1}]
  %5 = xla_tuple %s3, %s4
  %s6 = sld [smem:[#allocation0]]
  $region99: #{llard_forward.2} parent=0
    _
  %s8 = ssub.s32 1, %s6
  %s9 = scalar_select 0, %s8, %s6
  $region1: #{llard_forward.2} parent=0
    #allocation3 [shape = 'u8[262144]{0}', space=vmem, size = 0x40000, scoped, tag = 'input window, operand 0']
    loop: start=0, step=1, limit=6
    $region2: #{llard_forward.2} parent=1 // loop_pre_header
      _
    $region3: #{llard_forward.2} parent=1 // loop_header
      %s11 = sphi 0, %s15
      %p12 = scmp.ge.s32.totalorder %s11, 6
      %s18 = sphi 0, %s30
      %s19 = sphi 0, %s26
      %s20 = sphi 0, %s18
      %s21 = sphi 0, %s19
      %s22 = sphi 0, %s20
      %s23 = sphi 0, %s21
      %s35 = sphi 0, %s37
      %s38 = sphi 0, %s35
      %s39 = sphi 0, %s38
      %s55 = sphi 0, %s39
      %s59 = sphi 0, %s59
      %s61 = sphi 0, %s59
      %s62 = sphi 0, %s61
      %s76 = sphi 0, %s62
      %s82 = sphi 0, %s84
      %s85 = sphi 0, %s82
      %s86 = sphi 0, %s85
      %s102 = sphi 0, %s86
      %s108 = sphi 0, %s110
      %s111 = sphi 0, %s108
      %s112 = sphi 0, %s111
      %s128 = sphi 0, %s112
      %s134 = sphi 0, %s136
      %s137 = sphi 0, %s134
      %s138 = sphi 0, %s137
      %s154 = sphi 0, %s138
    $region4: #{llard_forward.2} parent=1 // loop_header_branch
      %14 = sbr.rel (%p12) target = $region8
    $region5: #{llard_forward.2} parent=1 // loop_body
      %s16 = ssub.s32 %s11, 1
      %s17 = ssub.s32 %s11, 2
      %s24 = sadd.s32 1, %s19
      %p25 = scmp.ge.s32.totalorder %s24, 2
      %s26 = scalar_select %p25, 0, %s24
      %s27 = sadd.s32 1, %s18
      %s28 = scalar_select %p25, %s27, %s18
      %p29 = scmp.ge.s32.totalorder %s28, 2
      %s30 = scalar_select %p29, 0, %s28
      %s31 = ssub.s32 %s18, %s30
      %s32 = ssub.s32 %s19, %s26
      %s33 = sor.u32 %s31, %s32
      %p34 = scmp.eq.s32.totalorder %s33, 0
      %s36 = sadd.s32 %s35, 1
      %s37 = scalar_select %p34, %s35, %s36
      %p40 = pneg %p34
      %p41 = scmp.eq.s32.totalorder %s11, 3
      %p42 = por %p40, %p41
      %p43 = scmp.ne.s32.totalorder %s35, %s38
      %p44 = scmp.eq.s32.totalorder %s11, 0
      %p45 = por %p43, %p44
      %p46 = scmp.ne.s32.totalorder %s35, %s38
      %p47 = scmp.eq.s32.totalorder %s16, 3
      %p48 = por %p46, %p47
      %p49 = scmp.ne.s32.totalorder %s38, %s39
      %p50 = scmp.eq.s32.totalorder %s16, 0
      %p51 = por %p49, %p50
      %p52 = scmp.ne.s32.totalorder %s38, %s39
      %p53 = scmp.eq.s32.totalorder %s17, 3
      %p54 = por %p52, %p53
      %p56 = scmp.ne.s32.totalorder %s39, %s55
      %p57 = scmp.eq.s32.totalorder %s17, 0
      %p58 = por %p56, %p57
      %s60 = sadd.s32 %s59, 1
      %p63 = scmp.eq.s32.totalorder %s11, 3
      %p64 = scmp.ne.s32.totalorder %s59, %s61
      %p65 = scmp.eq.s32.totalorder %s11, 0
      %p66 = por %p64, %p65
      %p67 = scmp.ne.s32.totalorder %s59, %s61
      %p68 = scmp.eq.s32.totalorder %s16, 3
      %p69 = por %p67, %p68
      %p70 = scmp.ne.s32.totalorder %s61, %s62
      %p71 = scmp.eq.s32.totalorder %s16, 0
      %p72 = por %p70, %p71
      %p73 = scmp.ne.s32.totalorder %s61, %s62
      %p74 = scmp.eq.s32.totalorder %s17, 3
      %p75 = por %p73, %p74
      %p77 = scmp.ne.s32.totalorder %s62, %s76
      %p78 = scmp.eq.s32.totalorder %s17, 0
      %p79 = por %p77, %p78
      %s80 = ssub.s32 %s18, %s30
      %p81 = scmp.eq.s32.totalorder %s80, 0
      %s83 = sadd.s32 %s82, 1
      %s84 = scalar_select %p81, %s82, %s83
      %p87 = pneg %p81
      %p88 = scmp.eq.s32.totalorder %s11, 3
      %p89 = por %p87, %p88
      %p90 = scmp.ne.s32.totalorder %s82, %s85
      %p91 = scmp.eq.s32.totalorder %s11, 0
      %p92 = por %p90, %p91
      %p93 = scmp.ne.s32.totalorder %s82, %s85
      %p94 = scmp.eq.s32.totalorder %s16, 3
      %p95 = por %p93, %p94
      %p96 = scmp.ne.s32.totalorder %s85, %s86
      %p97 = scmp.eq.s32.totalorder %s16, 0
      %p98 = por %p96, %p97
      %p99 = scmp.ne.s32.totalorder %s85, %s86
      %p100 = scmp.eq.s32.totalorder %s17, 3
      %p101 = por %p99, %p100
      %p103 = scmp.ne.s32.totalorder %s86, %s102
      %p104 = scmp.eq.s32.totalorder %s17, 0
      %p105 = por %p103, %p104
      %s106 = ssub.s32 %s18, %s30
      %p107 = scmp.eq.s32.totalorder %s106, 0
      %s109 = sadd.s32 %s108, 1
      %s110 = scalar_select %p107, %s108, %s109
      %p113 = pneg %p107
      %p114 = scmp.eq.s32.totalorder %s11, 3
      %p115 = por %p113, %p114
      %p116 = scmp.ne.s32.totalorder %s108, %s111
      %p117 = scmp.eq.s32.totalorder %s11, 0
      %p118 = por %p116, %p117
      %p119 = scmp.ne.s32.totalorder %s108, %s111
      %p120 = scmp.eq.s32.totalorder %s16, 3
      %p121 = por %p119, %p120
      %p122 = scmp.ne.s32.totalorder %s111, %s112
      %p123 = scmp.eq.s32.totalorder %s16, 0
      %p124 = por %p122, %p123
      %p125 = scmp.ne.s32.totalorder %s111, %s112
      %p126 = scmp.eq.s32.totalorder %s17, 3
      %p127 = por %p125, %p126
      %p129 = scmp.ne.s32.totalorder %s112, %s128
      %p130 = scmp.eq.s32.totalorder %s17, 0
      %p131 = por %p129, %p130
      %s132 = ssub.s32 %s18, %s30
      %p133 = scmp.eq.s32.totalorder %s132, 0
      %s135 = sadd.s32 %s134, 1
      %s136 = scalar_select %p133, %s134, %s135
      %p139 = pneg %p133
      %p140 = scmp.eq.s32.totalorder %s11, 3
      %p141 = por %p139, %p140
      %p142 = scmp.ne.s32.totalorder %s134, %s137
      %p143 = scmp.eq.s32.totalorder %s11, 0
      %p144 = por %p142, %p143
      %p145 = scmp.ne.s32.totalorder %s134, %s137
      %p146 = scmp.eq.s32.totalorder %s16, 3
      %p147 = por %p145, %p146
      %p148 = scmp.ne.s32.totalorder %s137, %s138
      %p149 = scmp.eq.s32.totalorder %s16, 0
      %p150 = por %p148, %p149
      %p151 = scmp.ne.s32.totalorder %s137, %s138
      %p152 = scmp.eq.s32.totalorder %s17, 3
      %p153 = por %p151, %p152
      %p155 = scmp.ne.s32.totalorder %s138, %s154
      %p156 = scmp.eq.s32.totalorder %s17, 0
      %p157 = por %p155, %p156
      %p158 = scmp.le.s32.totalorder 1, %s11
      %p159 = scmp.lt.s32.totalorder %s11, 5
      %p160 = pnand %p158, %p159
      %p161 = pneg %p160
      // Predicated region
      $region9: #{llard_forward.2} parent=5 // pred_check
        _
      $region10: #{llard_forward.2} parent=5 // pred_check_branch
        %163 = sbr.rel (%p160) target = $region12
      $region11: #{llard_forward.2} parent=5 // pred_region
        %s164 = ssub.s32 %s11, 1
        // Predicated region
        $region13: #{llard_forward.2} parent=11 // pred_check
          %p165 = pneg %p72
        $region14: #{llard_forward.2} parent=11 // pred_check_branch
          %167 = sbr.rel (%p165) target = $region16
        $region15: #{llard_forward.2} parent=11 // pred_region
          _
        $region16: #{llard_forward.2} parent=11 // pred_fallthru
          _
      $region12: #{llard_forward.2} parent=5 // pred_fallthru
        _
      %p168 = scmp.lt.s32.totalorder %s11, 4
      // Predicated region
      $region17: #{llard_forward.2} parent=5 // pred_check
        %p169 = pneg %p168
      $region18: #{llard_forward.2} parent=5 // pred_check_branch
        %171 = sbr.rel (%p169) target = $region20
      $region19: #{llard_forward.2} parent=5 // pred_region
        // Predicated region
        $region21: #{llard_forward.2} parent=19 // pred_check
          %p172 = pneg %p45
        $region22: #{llard_forward.2} parent=19 // pred_check_branch
          %174 = sbr.rel (%p172) target = $region24
        $region23: #{llard_forward.2} parent=19 // pred_region
          %s175 = sand.u32 %s35, 1
          %s176 = sand.u32 %s35, 1
          %s177 = smul.addr %s176, 256
          %s178 = scalar_lea.vmem [#allocation3], %s177
          %s179 = smul.u32 32, %s18
          %s180 = smul.u32 2, %s19
          %s181 = smul.addr %s179, 4
          %s182 = sadd.s32 %s180, %s181
          %s183 = smul.addr %s182, 4
          %s184 = scalar_lea.vmem %s0, %s183
          // Predicated region
          $region25: #{llard_forward.2} parent=23 // pred_check
            _
          $region26: #{llard_forward.2} parent=23 // pred_check_branch
            %186 = sbr.rel (0) target = $region28
          $region27: #{llard_forward.2} parent=23 // pred_region
            // Predicated region
            $region29: #{llard_forward.2} parent=27 // pred_check
              _
            $region30: #{llard_forward.2} parent=27 // pred_check_branch
              %188 = sbr.rel (0) target = $region32
            $region31: #{llard_forward.2} parent=27 // pred_region
              // Predicated region
              $region44: #{llard_forward.2} parent=31 // pred_check
                _
              $region45: #{llard_forward.2} parent=31 // pred_check_branch
                %266 = sbr.rel (0) target = $region47
              $region46: #{llard_forward.2} parent=31 // pred_region
                loop: start=0, step=1, limit=1
                $region48: #{llard_forward.2} parent=46 // loop_pre_header
                  _
                $region49: #{llard_forward.2} parent=46 // loop_header
                  %s268 = sphi 0, %s272
                  %p269 = scmp.ge.s32.totalorder %s268, 1
                  %s273 = sphi %s184, %s184
                  %s274 = sphi %s178, %s178
                $region50: #{llard_forward.2} parent=46 // loop_header_branch
                  %271 = sbr.rel (%p269) target = $region54
                $region51: #{llard_forward.2} parent=46 // loop_body
                  %v275 = vld [vmem:[%s273] sm:$0xff]
                  %276 = vst [vmem:[%s274] sm:$0xff] %v275
                  %v277 = vld [vmem:[%s273 + $0x10] sm:$0xff]
                  %278 = vst [vmem:[%s274 + $0x8] sm:$0xff] %v277
                  %v279 = vld [vmem:[%s273 + $0x20] sm:$0xff]
                  %280 = vst [vmem:[%s274 + $0x10] sm:$0xff] %v279
                  %v281 = vld [vmem:[%s273 + $0x30] sm:$0xff]
                  %282 = vst [vmem:[%s274 + $0x18] sm:$0xff] %v281
                  %v283 = vld [vmem:[%s273 + $0x40] sm:$0xff]
                  %284 = vst [vmem:[%s274 + $0x20] sm:$0xff] %v283
                  %v285 = vld [vmem:[%s273 + $0x50] sm:$0xff]
                  %286 = vst [vmem:[%s274 + $0x28] sm:$0xff] %v285
                  %v287 = vld [vmem:[%s273 + $0x60] sm:$0xff]
                  %288 = vst [vmem:[%s274 + $0x30] sm:$0xff] %v287
                  %v289 = vld [vmem:[%s273 + $0x70] sm:$0xff]
                  %290 = vst [vmem:[%s274 + $0x38] sm:$0xff] %v289
                  %v291 = vld [vmem:[%s273 + $0x80] sm:$0xff]
                  %292 = vst [vmem:[%s274 + $0x40] sm:$0xff] %v291
                  %v293 = vld [vmem:[%s273 + $0x90] sm:$0xff]
                  %294 = vst [vmem:[%s274 + $0x48] sm:$0xff] %v293
                  %v295 = vld [vmem:[%s273 + $0xa0] sm:$0xff]
                  %296 = vst [vmem:[%s274 + $0x50] sm:$0xff] %v295
                  %v297 = vld [vmem:[%s273 + $0xb0] sm:$0xff]
                  %298 = vst [vmem:[%s274 + $0x58] sm:$0xff] %v297
                  %v299 = vld [vmem:[%s273 + $0xc0] sm:$0xff]
                  %300 = vst [vmem:[%s274 + $0x60] sm:$0xff] %v299
                  %v301 = vld [vmem:[%s273 + $0xd0] sm:$0xff]
                  %302 = vst [vmem:[%s274 + $0x68] sm:$0xff] %v301
                  %v303 = vld [vmem:[%s273 + $0xe0] sm:$0xff]
                  %304 = vst [vmem:[%s274 + $0x70] sm:$0xff] %v303
                  %v305 = vld [vmem:[%s273 + $0xf0] sm:$0xff]
                  %306 = vst [vmem:[%s274 + $0x78] sm:$0xff] %v305
                  %v307 = vld [vmem:[%s273 + $0x100] sm:$0xff]
                  %308 = vst [vmem:[%s274 + $0x80] sm:$0xff] %v307
                  %v309 = vld [vmem:[%s273 + $0x110] sm:$0xff]
                  %310 = vst [vmem:[%s274 + $0x88] sm:$0xff] %v309
                  %v311 = vld [vmem:[%s273 + $0x120] sm:$0xff]
                  %312 = vst [vmem:[%s274 + $0x90] sm:$0xff] %v311
                  %v313 = vld [vmem:[%s273 + $0x130] sm:$0xff]
                  %314 = vst [vmem:[%s274 + $0x98] sm:$0xff] %v313
                  %v315 = vld [vmem:[%s273 + $0x140] sm:$0xff]
                  %316 = vst [vmem:[%s274 + $0xa0] sm:$0xff] %v315
                  %v317 = vld [vmem:[%s273 + $0x150] sm:$0xff]
                  %318 = vst [vmem:[%s274 + $0xa8] sm:$0xff] %v317
                  %v319 = vld [vmem:[%s273 + $0x160] sm:$0xff]
                  %320 = vst [vmem:[%s274 + $0xb0] sm:$0xff] %v319
                  %v321 = vld [vmem:[%s273 + $0x170] sm:$0xff]
                  %322 = vst [vmem:[%s274 + $0xb8] sm:$0xff] %v321
                  %v323 = vld [vmem:[%s273 + $0x180] sm:$0xff]
                  %324 = vst [vmem:[%s274 + $0xc0] sm:$0xff] %v323
                  %v325 = vld [vmem:[%s273 + $0x190] sm:$0xff]
                  %326 = vst [vmem:[%s274 + $0xc8] sm:$0xff] %v325
                  %v327 = vld [vmem:[%s273 + $0x1a0] sm:$0xff]
                  %328 = vst [vmem:[%s274 + $0xd0] sm:$0xff] %v327
                  %v329 = vld [vmem:[%s273 + $0x1b0] sm:$0xff]
                  %330 = vst [vmem:[%s274 + $0xd8] sm:$0xff] %v329
                  %v331 = vld [vmem:[%s273 + $0x1c0] sm:$0xff]
                  %332 = vst [vmem:[%s274 + $0xe0] sm:$0xff] %v331
                  %v333 = vld [vmem:[%s273 + $0x1d0] sm:$0xff]
                  %334 = vst [vmem:[%s274 + $0xe8] sm:$0xff] %v333
                  %v335 = vld [vmem:[%s273 + $0x1e0] sm:$0xff]
                  %336 = vst [vmem:[%s274 + $0xf0] sm:$0xff] %v335
                  %v337 = vld [vmem:[%s273 + $0x1f0] sm:$0xff]
                  %338 = vst [vmem:[%s274 + $0xf8] sm:$0xff] %v337
                $region52: #{llard_forward.2} parent=46 // loop_footer
                  %s272 = sadd.s32 1, %s268
                $region53: #{llard_forward.2} parent=46 // loop_footer_branch
                  %267 = sbr.rel target = $region49
                $region54: #{llard_forward.2} parent=46 // loop_exit
                  _
              $region47: #{llard_forward.2} parent=31 // pred_fallthru
                _
              // Predicated region
              $region55: #{llard_forward.2} parent=31 // pred_check
                _
              $region56: #{llard_forward.2} parent=31 // pred_check_branch
                %340 = sbr.rel target = $region58
              $region57: #{llard_forward.2} parent=31 // pred_region
                _
              $region58: #{llard_forward.2} parent=31 // pred_fallthru
                _
            $region32: #{llard_forward.2} parent=27 // pred_fallthru
              _
            // Predicated region
            $region33: #{llard_forward.2} parent=27 // pred_check
              _
            $region34: #{llard_forward.2} parent=27 // pred_check_branch
              %190 = sbr.rel target = $region36
            $region35: #{llard_forward.2} parent=27 // pred_region
              %s192 = ssub.s32 256, 1
              loop: start=0, step=1, limit=1
              $region37: #{llard_forward.2} parent=35 // loop_pre_header
                _
              $region38: #{llard_forward.2} parent=35 // loop_header
                %s194 = sphi 0, %s198
                %p195 = scmp.ge.s32.totalorder %s194, 1
                %s199 = sphi %s184, %s184
                %s200 = sphi %s178, %s178
              $region39: #{llard_forward.2} parent=35 // loop_header_branch
                %197 = sbr.rel (%p195) target = $region43
              $region40: #{llard_forward.2} parent=35 // loop_body
                %v201 = vld [vmem:[%s199] sm:%s192]
                %202 = vst [vmem:[%s200] sm:%s192] %v201
                %v203 = vld [vmem:[%s199 + $0x10] sm:%s192]
                %204 = vst [vmem:[%s200 + $0x8] sm:%s192] %v203
                %v205 = vld [vmem:[%s199 + $0x20] sm:%s192]
                %206 = vst [vmem:[%s200 + $0x10] sm:%s192] %v205
                %v207 = vld [vmem:[%s199 + $0x30] sm:%s192]
                %208 = vst [vmem:[%s200 + $0x18] sm:%s192] %v207
                %v209 = vld [vmem:[%s199 + $0x40] sm:%s192]
                %210 = vst [vmem:[%s200 + $0x20] sm:%s192] %v209
                %v211 = vld [vmem:[%s199 + $0x50] sm:%s192]
                %212 = vst [vmem:[%s200 + $0x28] sm:%s192] %v211
                %v213 = vld [vmem:[%s199 + $0x60] sm:%s192]
                %214 = vst [vmem:[%s200 + $0x30] sm:%s192] %v213
                %v215 = vld [vmem:[%s199 + $0x70] sm:%s192]
                %216 = vst [vmem:[%s200 + $0x38] sm:%s192] %v215
                %v217 = vld [vmem:[%s199 + $0x80] sm:%s192]
                %218 = vst [vmem:[%s200 + $0x40] sm:%s192] %v217
                %v219 = vld [vmem:[%s199 + $0x90] sm:%s192]
                %220 = vst [vmem:[%s200 + $0x48] sm:%s192] %v219
                %v221 = vld [vmem:[%s199 + $0xa0] sm:%s192]
                %222 = vst [vmem:[%s200 + $0x50] sm:%s192] %v221
                %v223 = vld [vmem:[%s199 + $0xb0] sm:%s192]
                %224 = vst [vmem:[%s200 + $0x58] sm:%s192] %v223
                %v225 = vld [vmem:[%s199 + $0xc0] sm:%s192]
                %226 = vst [vmem:[%s200 + $0x60] sm:%s192] %v225
                %v227 = vld [vmem:[%s199 + $0xd0] sm:%s192]
                %228 = vst [vmem:[%s200 + $0x68] sm:%s192] %v227
                %v229 = vld [vmem:[%s199 + $0xe0] sm:%s192]
                %230 = vst [vmem:[%s200 + $0x70] sm:%s192] %v229
                %v231 = vld [vmem:[%s199 + $0xf0] sm:%s192]
                %232 = vst [vmem:[%s200 + $0x78] sm:%s192] %v231
                %v233 = vld [vmem:[%s199 + $0x100] sm:%s192]
                %234 = vst [vmem:[%s200 + $0x80] sm:%s192] %v233
                %v235 = vld [vmem:[%s199 + $0x110] sm:%s192]
                %236 = vst [vmem:[%s200 + $0x88] sm:%s192] %v235
                %v237 = vld [vmem:[%s199 + $0x120] sm:%s192]
                %238 = vst [vmem:[%s200 + $0x90] sm:%s192] %v237
                %v239 = vld [vmem:[%s199 + $0x130] sm:%s192]
                %240 = vst [vmem:[%s200 + $0x98] sm:%s192] %v239
                %v241 = vld [vmem:[%s199 + $0x140] sm:%s192]
                %242 = vst [vmem:[%s200 + $0xa0] sm:%s192] %v241
                %v243 = vld [vmem:[%s199 + $0x150] sm:%s192]
                %244 = vst [vmem:[%s200 + $0xa8] sm:%s192] %v243
                %v245 = vld [vmem:[%s199 + $0x160] sm:%s192]
                %246 = vst [vmem:[%s200 + $0xb0] sm:%s192] %v245
                %v247 = vld [vmem:[%s199 + $0x170] sm:%s192]
                %248 = vst [vmem:[%s200 + $0xb8] sm:%s192] %v247
                %v249 = vld [vmem:[%s199 + $0x180] sm:%s192]
                %250 = vst [vmem:[%s200 + $0xc0] sm:%s192] %v249
                %v251 = vld [vmem:[%s199 + $0x190] sm:%s192]
                %252 = vst [vmem:[%s200 + $0xc8] sm:%s192] %v251
                %v253 = vld [vmem:[%s199 + $0x1a0] sm:%s192]
                %254 = vst [vmem:[%s200 + $0xd0] sm:%s192] %v253
                %v255 = vld [vmem:[%s199 + $0x1b0] sm:%s192]
                %256 = vst [vmem:[%s200 + $0xd8] sm:%s192] %v255
                %v257 = vld [vmem:[%s199 + $0x1c0] sm:%s192]
                %258 = vst [vmem:[%s200 + $0xe0] sm:%s192] %v257
                %v259 = vld [vmem:[%s199 + $0x1d0] sm:%s192]
                %260 = vst [vmem:[%s200 + $0xe8] sm:%s192] %v259
                %v261 = vld [vmem:[%s199 + $0x1e0] sm:%s192]
                %262 = vst [vmem:[%s200 + $0xf0] sm:%s192] %v261
                %v263 = vld [vmem:[%s199 + $0x1f0] sm:%s192]
                %264 = vst [vmem:[%s200 + $0xf8] sm:%s192] %v263
              $region41: #{llard_forward.2} parent=35 // loop_footer
                %s198 = sadd.s32 1, %s194
              $region42: #{llard_forward.2} parent=35 // loop_footer_branch
                %193 = sbr.rel target = $region38
              $region43: #{llard_forward.2} parent=35 // loop_exit
                _
            $region36: #{llard_forward.2} parent=27 // pred_fallthru
              _
          $region28: #{llard_forward.2} parent=23 // pred_fallthru
            _
          %341 = vnop
        $region24: #{llard_forward.2} parent=19 // pred_fallthru
          _
        // Predicated region
        $region59: #{llard_forward.2} parent=19 // pred_check
          %p342 = pneg %p92
        $region60: #{llard_forward.2} parent=19 // pred_check_branch
          %344 = sbr.rel (%p342) target = $region62
        $region61: #{llard_forward.2} parent=19 // pred_region
          %s345 = smul.u32 32, %s18
          %p346 = scmp.lt.s32.totalorder %s345, 63
          %s347 = scalar_select %p346, %s345, 63
          %s348 = smul.addr %s347, 8
          %s349 = scalar_lea.vmem %s2, %s348
          %s350 = smul.u32 32, %s18
        $region62: #{llard_forward.2} parent=19 // pred_fallthru
          _
      $region20: #{llard_forward.2} parent=5 // pred_fallthru
        _
      %p351 = scmp.le.s32.totalorder 1, %s11
      %p352 = scmp.lt.s32.totalorder %s11, 5
      %p353 = pnand %p351, %p352
      %p354 = pneg %p353
      // Predicated region
      $region63: #{llard_forward.2} parent=5 // pred_check
        _
      $region64: #{llard_forward.2} parent=5 // pred_check_branch
        %356 = sbr.rel (%p353) target = $region66
      $region65: #{llard_forward.2} parent=5 // pred_region
        %s357 = ssub.s32 %s11, 1
        %s358 = sand.u32 %s38, 1
        %s359 = sand.u32 %s38, 1
        %s360 = smul.addr %s359, 256
        %s361 = scalar_lea.vmem [#allocation3], %s360
        // Predicated region
        $region67: #{llard_forward.2} parent=65 // pred_check
          %p362 = pneg %p51
        $region68: #{llard_forward.2} parent=65 // pred_check_branch
          %364 = sbr.rel (%p362) target = $region70
        $region69: #{llard_forward.2} parent=65 // pred_region
          _
        $region70: #{llard_forward.2} parent=65 // pred_fallthru
          _
        %s365 = sand.u32 %s38, 1
        %s366 = sand.u32 %s38, 1
        %s367 = smul.addr %s366, 256
        %s368 = scalar_lea.vmem [#allocation3], %s367
        %p369 = pneg %p51
        %p370 = pneg %p48
        %p371 = pneg %p72
        %p372 = pneg %p69
        %s373 = smul.u32 32, %s20
        %p374 = scmp.lt.s32.totalorder %s373, 63
        %s375 = scalar_select %p374, %s373, 63
        %s376 = smul.addr %s375, 8
        %s377 = scalar_lea.vmem %s2, %s376
        %p378 = pneg %p98
        %p379 = pneg %p95
        %p380 = pneg %p124
        %p381 = pneg %p121
        %s382 = smul.u32 32, %s20
        %p383 = scmp.lt.s32.totalorder %s382, 63
        %s384 = scalar_select %p383, %s382, 63
        %s385 = smul.addr %s384, 8
        %s386 = scalar_lea.vmem %s3, %s385
        %p387 = pneg %p150
        %p388 = pneg %p147
        %s389 = smul.u32 32, %s20
        %p390 = scmp.lt.s32.totalorder %s389, 63
        %s391 = scalar_select %p390, %s389, 63
        %s392 = smul.addr %s391, 4
        %s393 = scalar_lea.vmem %s4, %s392
        %s394 = smul.u32 32, %s20
        %s395 = smul.u32 2, %s21
        %s396 = smul.u32 32, %s20
        %p397 = scmp.lt.s32.totalorder %s396, 63
        %s398 = scalar_select %p397, %s396, 63
        %s399 = smul.addr %s398, 8
        %s400 = scalar_lea.vmem %s2, %s399
        %s401 = smul.u32 32, %s20
        %s402 = smul.u32 32, %s20
        %p403 = scmp.lt.s32.totalorder %s402, 63
        %s404 = scalar_select %p403, %s402, 63
        %s405 = smul.addr %s404, 8
        %s406 = scalar_lea.vmem %s3, %s405
        %s407 = smul.u32 32, %s20
        %s408 = smul.u32 32, %s20
        %p409 = scmp.lt.s32.totalorder %s408, 63
        %s410 = scalar_select %p409, %s408, 63
        %s411 = smul.addr %s410, 4
        %s412 = scalar_lea.vmem %s4, %s411
        %s413 = smul.u32 32, %s20
        %p415 = scmp.eq.s32.totalorder %s21, 0
        // Predicated region
        $region71: #{llard_forward.2} parent=65 // pred_check
          %p416 = pneg %p415
        $region72: #{llard_forward.2} parent=65 // pred_check_branch
          %418 = sbr.rel (%p416) target = $region74
        $region73: #{llard_forward.2} parent=65 // pred_region
          %419 = vst [vmem:[#allocation2] sm:$0xff] 0.0
          %420 = vst [vmem:[#allocation2 + $0x8] sm:$0xff] 0.0
          %421 = vst [vmem:[#allocation2 + $0x10] sm:$0xff] 0.0
          %422 = vst [vmem:[#allocation2 + $0x18] sm:$0xff] 0.0
          %423 = vst [vmem:[#allocation2 + $0x20] sm:$0xff] 0.0
          %424 = vst [vmem:[#allocation2 + $0x28] sm:$0xff] 0.0
          %425 = vst [vmem:[#allocation2 + $0x30] sm:$0xff] 0.0
          %426 = vst [vmem:[#allocation2 + $0x38] sm:$0xff] 0.0
          %427 = vst [vmem:[#allocation2 + $0x40] sm:$0xff] 0.0
          %428 = vst [vmem:[#allocation2 + $0x48] sm:$0xff] 0.0
          %429 = vst [vmem:[#allocation2 + $0x50] sm:$0xff] 0.0
          %430 = vst [vmem:[#allocation2 + $0x58] sm:$0xff] 0.0
          %431 = vst [vmem:[#allocation2 + $0x60] sm:$0xff] 0.0
          %432 = vst [vmem:[#allocation2 + $0x68] sm:$0xff] 0.0
          %433 = vst [vmem:[#allocation2 + $0x70] sm:$0xff] 0.0
          %434 = vst [vmem:[#allocation2 + $0x78] sm:$0xff] 0.0
          %435 = vst [vmem:[#allocation2 + $0x80] sm:$0xff] 0.0
          %436 = vst [vmem:[#allocation2 + $0x88] sm:$0xff] 0.0
          %437 = vst [vmem:[#allocation2 + $0x90] sm:$0xff] 0.0
          %438 = vst [vmem:[#allocation2 + $0x98] sm:$0xff] 0.0
          %439 = vst [vmem:[#allocation2 + $0xa0] sm:$0xff] 0.0
          %440 = vst [vmem:[#allocation2 + $0xa8] sm:$0xff] 0.0
          %441 = vst [vmem:[#allocation2 + $0xb0] sm:$0xff] 0.0
          %442 = vst [vmem:[#allocation2 + $0xb8] sm:$0xff] 0.0
          %443 = vst [vmem:[#allocation2 + $0xc0] sm:$0xff] 0.0
          %444 = vst [vmem:[#allocation2 + $0xc8] sm:$0xff] 0.0
          %445 = vst [vmem:[#allocation2 + $0xd0] sm:$0xff] 0.0
          %446 = vst [vmem:[#allocation2 + $0xd8] sm:$0xff] 0.0
          %447 = vst [vmem:[#allocation2 + $0xe0] sm:$0xff] 0.0
          %448 = vst [vmem:[#allocation2 + $0xe8] sm:$0xff] 0.0
          %449 = vst [vmem:[#allocation2 + $0xf0] sm:$0xff] 0.0
          %450 = vst [vmem:[#allocation2 + $0xf8] sm:$0xff] 0.0
        $region74: #{llard_forward.2} parent=65 // pred_fallthru
          _
        %s451 = smul.u32 %s21, 256
        %v452 = vld [vmem:[#allocation2] sm:$0xff]
        %v453 = vld [vmem:[#allocation2 + $0x8] sm:$0xff]
        %v454 = vld [vmem:[#allocation2 + $0x10] sm:$0xff]
        %v455 = vld [vmem:[#allocation2 + $0x18] sm:$0xff]
        %v456 = vld [vmem:[#allocation2 + $0x20] sm:$0xff]
        %v457 = vld [vmem:[#allocation2 + $0x28] sm:$0xff]
        %v458 = vld [vmem:[#allocation2 + $0x30] sm:$0xff]
        %v459 = vld [vmem:[#allocation2 + $0x38] sm:$0xff]
        %v460 = vld [vmem:[#allocation2 + $0x40] sm:$0xff]
        %v461 = vld [vmem:[#allocation2 + $0x48] sm:$0xff]
        %v462 = vld [vmem:[#allocation2 + $0x50] sm:$0xff]
        %v463 = vld [vmem:[#allocation2 + $0x58] sm:$0xff]
        %v464 = vld [vmem:[#allocation2 + $0x60] sm:$0xff]
        %v465 = vld [vmem:[#allocation2 + $0x68] sm:$0xff]
        %v466 = vld [vmem:[#allocation2 + $0x70] sm:$0xff]
        %v467 = vld [vmem:[#allocation2 + $0x78] sm:$0xff]
        %v468 = vld [vmem:[#allocation2 + $0x80] sm:$0xff]
        %v469 = vld [vmem:[#allocation2 + $0x88] sm:$0xff]
        %v470 = vld [vmem:[#allocation2 + $0x90] sm:$0xff]
        %v471 = vld [vmem:[#allocation2 + $0x98] sm:$0xff]
        %v472 = vld [vmem:[#allocation2 + $0xa0] sm:$0xff]
        %v473 = vld [vmem:[#allocation2 + $0xa8] sm:$0xff]
        %v474 = vld [vmem:[#allocation2 + $0xb0] sm:$0xff]
        %v475 = vld [vmem:[#allocation2 + $0xb8] sm:$0xff]
        %v476 = vld [vmem:[#allocation2 + $0xc0] sm:$0xff]
        %v477 = vld [vmem:[#allocation2 + $0xc8] sm:$0xff]
        %v478 = vld [vmem:[#allocation2 + $0xd0] sm:$0xff]
        %v479 = vld [vmem:[#allocation2 + $0xd8] sm:$0xff]
        %v480 = vld [vmem:[#allocation2 + $0xe0] sm:$0xff]
        %v481 = vld [vmem:[#allocation2 + $0xe8] sm:$0xff]
        %v482 = vld [vmem:[#allocation2 + $0xf0] sm:$0xff]
        %v483 = vld [vmem:[#allocation2 + $0xf8] sm:$0xff]
        %v484 = vld [vmem:[%s361] sm:$0xff]
        %v485 = vld [vmem:[%s361 + $0x8] sm:$0xff]
        %v486 = vld [vmem:[%s361 + $0x10] sm:$0xff]
        %v487 = vld [vmem:[%s361 + $0x18] sm:$0xff]
        %v488 = vld [vmem:[%s361 + $0x20] sm:$0xff]
        %v489 = vld [vmem:[%s361 + $0x28] sm:$0xff]
        %v490 = vld [vmem:[%s361 + $0x30] sm:$0xff]
        %v491 = vld [vmem:[%s361 + $0x38] sm:$0xff]
        %v492 = vld [vmem:[%s361 + $0x40] sm:$0xff]
        %v493 = vld [vmem:[%s361 + $0x48] sm:$0xff]
        %v494 = vld [vmem:[%s361 + $0x50] sm:$0xff]
        %v495 = vld [vmem:[%s361 + $0x58] sm:$0xff]
        %v496 = vld [vmem:[%s361 + $0x60] sm:$0xff]
        %v497 = vld [vmem:[%s361 + $0x68] sm:$0xff]
        %v498 = vld [vmem:[%s361 + $0x70] sm:$0xff]
        %v499 = vld [vmem:[%s361 + $0x78] sm:$0xff]
        %v500 = vld [vmem:[%s361 + $0x80] sm:$0xff]
        %v501 = vld [vmem:[%s361 + $0x88] sm:$0xff]
        %v502 = vld [vmem:[%s361 + $0x90] sm:$0xff]
        %v503 = vld [vmem:[%s361 + $0x98] sm:$0xff]
        %v504 = vld [vmem:[%s361 + $0xa0] sm:$0xff]
        %v505 = vld [vmem:[%s361 + $0xa8] sm:$0xff]
        %v506 = vld [vmem:[%s361 + $0xb0] sm:$0xff]
        %v507 = vld [vmem:[%s361 + $0xb8] sm:$0xff]
        %v508 = vld [vmem:[%s361 + $0xc0] sm:$0xff]
        %v509 = vld [vmem:[%s361 + $0xc8] sm:$0xff]
        %v510 = vld [vmem:[%s361 + $0xd0] sm:$0xff]
        %v511 = vld [vmem:[%s361 + $0xd8] sm:$0xff]
        %v512 = vld [vmem:[%s361 + $0xe0] sm:$0xff]
        %v513 = vld [vmem:[%s361 + $0xe8] sm:$0xff]
        %v514 = vld [vmem:[%s361 + $0xf0] sm:$0xff]
        %v515 = vld [vmem:[%s361 + $0xf8] sm:$0xff]
        %s516 = sshra.s32 %s451, 3
        %s517 = sand.u32 %s451, 7
        %s518 = smul.addr %s516, 4
        %s519 = scalar_lea.vmem %s1, %s518
        %v520 = vld [vmem:[%s519] sm:$0xf]
        %v521 = vld [vmem:[%s519 + $0x4] sm:$0xf]
        %v522 = vld [vmem:[%s519 + $0x8] sm:$0xf]
        %v523 = vld [vmem:[%s519 + $0xc] sm:$0xf]
        %v524 = vld [vmem:[%s519 + $0x10] sm:$0xf]
        %v525 = vld [vmem:[%s519 + $0x14] sm:$0xf]
        %v526 = vld [vmem:[%s519 + $0x18] sm:$0xf]
        %v527 = vld [vmem:[%s519 + $0x1c] sm:$0xf]
        %v528 = vld [vmem:[%s519 + $0x20] sm:$0xf]
        %v529 = vld [vmem:[%s519 + $0x24] sm:$0xf]
        %v530 = vld [vmem:[%s519 + $0x28] sm:$0xf]
        %v531 = vld [vmem:[%s519 + $0x2c] sm:$0xf]
        %v532 = vld [vmem:[%s519 + $0x30] sm:$0xf]
        %v533 = vld [vmem:[%s519 + $0x34] sm:$0xf]
        %v534 = vld [vmem:[%s519 + $0x38] sm:$0xf]
        %v535 = vld [vmem:[%s519 + $0x3c] sm:$0xf]
        %v536 = vld [vmem:[%s519 + $0x40] sm:$0xf]
        %v537 = vld [vmem:[%s519 + $0x44] sm:$0xf]
        %v538 = vld [vmem:[%s519 + $0x48] sm:$0xf]
        %v539 = vld [vmem:[%s519 + $0x4c] sm:$0xf]
        %v540 = vld [vmem:[%s519 + $0x50] sm:$0xf]
        %v541 = vld [vmem:[%s519 + $0x54] sm:$0xf]
        %v542 = vld [vmem:[%s519 + $0x58] sm:$0xf]
        %v543 = vld [vmem:[%s519 + $0x5c] sm:$0xf]
        %v544 = vld [vmem:[%s519 + $0x60] sm:$0xf]
        %v545 = vld [vmem:[%s519 + $0x64] sm:$0xf]
        %v546 = vld [vmem:[%s519 + $0x68] sm:$0xf]
        %v547 = vld [vmem:[%s519 + $0x6c] sm:$0xf]
        %v548 = vld [vmem:[%s519 + $0x70] sm:$0xf]
        %v549 = vld [vmem:[%s519 + $0x74] sm:$0xf]
        %v550 = vld [vmem:[%s519 + $0x78] sm:$0xf]
        %v551 = vld [vmem:[%s519 + $0x7c] sm:$0xf]
        %v584 = vunpack.c.l.b16 %v484
        %v585 = vunpack.c.h.b16 %v484
        %v586 = vunpack.c.l.b16 %v485
        %v587 = vunpack.c.h.b16 %v485
        %v588 = vunpack.c.l.b16 %v486
        %v589 = vunpack.c.h.b16 %v486
        %v590 = vunpack.c.l.b16 %v487
        %v591 = vunpack.c.h.b16 %v487
        %v592 = vunpack.c.l.b16 %v488
        %v593 = vunpack.c.h.b16 %v488
        %v594 = vunpack.c.l.b16 %v489
        %v595 = vunpack.c.h.b16 %v489
        %v596 = vunpack.c.l.b16 %v490
        %v597 = vunpack.c.h.b16 %v490
        %v598 = vunpack.c.l.b16 %v491
        %v599 = vunpack.c.h.b16 %v491
        %v600 = vunpack.c.l.b16 %v492
        %v601 = vunpack.c.h.b16 %v492
        %v602 = vunpack.c.l.b16 %v493
        %v603 = vunpack.c.h.b16 %v493
        %v604 = vunpack.c.l.b16 %v494
        %v605 = vunpack.c.h.b16 %v494
        %v606 = vunpack.c.l.b16 %v495
        %v607 = vunpack.c.h.b16 %v495
        %v608 = vunpack.c.l.b16 %v496
        %v609 = vunpack.c.h.b16 %v496
        %v610 = vunpack.c.l.b16 %v497
        %v611 = vunpack.c.h.b16 %v497
        %v612 = vunpack.c.l.b16 %v498
        %v613 = vunpack.c.h.b16 %v498
        %v614 = vunpack.c.l.b16 %v499
        %v615 = vunpack.c.h.b16 %v499
        %v616 = vunpack.c.l.b16 %v500
        %v617 = vunpack.c.h.b16 %v500
        %v618 = vunpack.c.l.b16 %v501
        %v619 = vunpack.c.h.b16 %v501
        %v620 = vunpack.c.l.b16 %v502
        %v621 = vunpack.c.h.b16 %v502
        %v622 = vunpack.c.l.b16 %v503
        %v623 = vunpack.c.h.b16 %v503
        %v624 = vunpack.c.l.b16 %v504
        %v625 = vunpack.c.h.b16 %v504
        %v626 = vunpack.c.l.b16 %v505
        %v627 = vunpack.c.h.b16 %v505
        %v628 = vunpack.c.l.b16 %v506
        %v629 = vunpack.c.h.b16 %v506
        %v630 = vunpack.c.l.b16 %v507
        %v631 = vunpack.c.h.b16 %v507
        %v632 = vunpack.c.l.b16 %v508
        %v633 = vunpack.c.h.b16 %v508
        %v634 = vunpack.c.l.b16 %v509
        %v635 = vunpack.c.h.b16 %v509
        %v636 = vunpack.c.l.b16 %v510
        %v637 = vunpack.c.h.b16 %v510
        %v638 = vunpack.c.l.b16 %v511
        %v639 = vunpack.c.h.b16 %v511
        %v640 = vunpack.c.l.b16 %v512
        %v641 = vunpack.c.h.b16 %v512
        %v642 = vunpack.c.l.b16 %v513
        %v643 = vunpack.c.h.b16 %v513
        %v644 = vunpack.c.l.b16 %v514
        %v645 = vunpack.c.h.b16 %v514
        %v646 = vunpack.c.l.b16 %v515
        %v647 = vunpack.c.h.b16 %v515
        %v648 = vpack.c.b16 %v586, %v584
        %v649 = vpack.c.b16 %v587, %v585
        %v650 = vpack.c.b16 %v590, %v588
        %v651 = vpack.c.b16 %v591, %v589
        %v652 = vpack.c.b16 %v594, %v592
        %v653 = vpack.c.b16 %v595, %v593
        %v654 = vpack.c.b16 %v598, %v596
        %v655 = vpack.c.b16 %v599, %v597
        %v656 = vpack.c.b16 %v602, %v600
        %v657 = vpack.c.b16 %v603, %v601
        %v658 = vpack.c.b16 %v606, %v604
        %v659 = vpack.c.b16 %v607, %v605
        %v660 = vpack.c.b16 %v610, %v608
        %v661 = vpack.c.b16 %v611, %v609
        %v662 = vpack.c.b16 %v614, %v612
        %v663 = vpack.c.b16 %v615, %v613
        %v664 = vpack.c.b16 %v618, %v616
        %v665 = vpack.c.b16 %v619, %v617
        %v666 = vpack.c.b16 %v622, %v620
        %v667 = vpack.c.b16 %v623, %v621
        %v668 = vpack.c.b16 %v626, %v624
        %v669 = vpack.c.b16 %v627, %v625
        %v670 = vpack.c.b16 %v630, %v628
        %v671 = vpack.c.b16 %v631, %v629
        %v672 = vpack.c.b16 %v634, %v632
        %v673 = vpack.c.b16 %v635, %v633
        %v674 = vpack.c.b16 %v638, %v636
        %v675 = vpack.c.b16 %v639, %v637
        %v676 = vpack.c.b16 %v642, %v640
        %v677 = vpack.c.b16 %v643, %v641
        %v678 = vpack.c.b16 %v646, %v644
        %v679 = vpack.c.b16 %v647, %v645
        %v744 = vunpack.c.l.b16 %v520
        %v745 = vunpack.c.l.b16 %v521
        %v746 = vunpack.c.l.b16 %v522
        %v747 = vunpack.c.l.b16 %v523
        %v748 = vunpack.c.l.b16 %v524
        %v749 = vunpack.c.l.b16 %v525
        %v750 = vunpack.c.l.b16 %v526
        %v751 = vunpack.c.l.b16 %v527
        %v752 = vunpack.c.l.b16 %v528
        %v753 = vunpack.c.l.b16 %v529
        %v754 = vunpack.c.l.b16 %v530
        %v755 = vunpack.c.l.b16 %v531
        %v756 = vunpack.c.l.b16 %v532
        %v757 = vunpack.c.l.b16 %v533
        %v758 = vunpack.c.l.b16 %v534
        %v759 = vunpack.c.l.b16 %v535
        %v760 = vunpack.c.l.b16 %v536
        %v761 = vunpack.c.l.b16 %v537
        %v762 = vunpack.c.l.b16 %v538
        %v763 = vunpack.c.l.b16 %v539
        %v764 = vunpack.c.l.b16 %v540
        %v765 = vunpack.c.l.b16 %v541
        %v766 = vunpack.c.l.b16 %v542
        %v767 = vunpack.c.l.b16 %v543
        %v768 = vunpack.c.l.b16 %v544
        %v769 = vunpack.c.l.b16 %v545
        %v770 = vunpack.c.l.b16 %v546
        %v771 = vunpack.c.l.b16 %v547
        %v772 = vunpack.c.l.b16 %v548
        %v773 = vunpack.c.l.b16 %v549
        %v774 = vunpack.c.l.b16 %v550
        %v775 = vunpack.c.l.b16 %v551
        %v776 = vpack.c.b16 %v745, %v744
        %v777 = vpack.c.b16 %v747, %v746
        %v778 = vpack.c.b16 %v749, %v748
        %v779 = vpack.c.b16 %v751, %v750
        %v780 = vpack.c.b16 %v753, %v752
        %v781 = vpack.c.b16 %v755, %v754
        %v782 = vpack.c.b16 %v757, %v756
        %v783 = vpack.c.b16 %v759, %v758
        %v784 = vpack.c.b16 %v761, %v760
        %v785 = vpack.c.b16 %v763, %v762
        %v786 = vpack.c.b16 %v765, %v764
        %v787 = vpack.c.b16 %v767, %v766
        %v788 = vpack.c.b16 %v769, %v768
        %v789 = vpack.c.b16 %v771, %v770
        %v790 = vpack.c.b16 %v773, %v772
        %v791 = vpack.c.b16 %v775, %v774
        %808 = vmatprep.subr.bf16.mxu0 0
        %809 = vmatpush1.bf16.msra.mxu0 %v783
        %810 = vmatprep.subr.bf16.mxu0 0
        %811 = vmatpush1.bf16.msra.mxu0 %v782
        %812 = vmatprep.subr.bf16.mxu0 0
        %813 = vmatpush1.bf16.msra.mxu0 %v781
        %814 = vmatprep.subr.bf16.mxu0 0
        %815 = vmatpush1.bf16.msra.mxu0 %v780
        %816 = vmatprep.subr.bf16.mxu0 0
        %817 = vmatpush1.bf16.msra.mxu0 %v779
        %818 = vmatprep.subr.bf16.mxu0 0
        %819 = vmatpush1.bf16.msra.mxu0 %v778
        %820 = vmatprep.subr.bf16.mxu0 0
        %821 = vmatpush1.bf16.msra.mxu0 %v777
        %822 = vmatprep.subr.bf16.mxu0 0
        %823 = vmatpush1.bf16.msra.mxu0 %v776
        %824 = vmatprep.subr.bf16.mxu0 0
        %825 = vmatpush2.bf16.msra.mxu0 %v791
        %826 = vmatprep.subr.bf16.mxu0 0
        %827 = vmatpush2.bf16.msra.mxu0 %v790
        %828 = vmatprep.subr.bf16.mxu0 0
        %829 = vmatpush2.bf16.msra.mxu0 %v789
        %830 = vmatprep.subr.bf16.mxu0 0
        %831 = vmatpush2.bf16.msra.mxu0 %v788
        %832 = vmatprep.subr.bf16.mxu0 0
        %833 = vmatpush2.bf16.msra.mxu0 %v787
        %834 = vmatprep.subr.bf16.mxu0 0
        %835 = vmatpush2.bf16.msra.mxu0 %v786
        %836 = vmatprep.subr.bf16.mxu0 0
        %837 = vmatpush2.bf16.msra.mxu0 %v785
        %838 = vmatprep.subr.bf16.mxu0 0
        %839 = vmatpush2.bf16.msra.mxu0 %v784
        %840 = vmatprep.mubr.bf16.mxu0 %v649
        %841 = vmatmul.mubr.bf16.gmra.mxu0 %v648
        %v842 = vpop.f32.mrf.mxu0
        %v843 = vadd.f32 0.0, %v842
        %v844 = vpop.f32.mrf.mxu0
        %v845 = vpop.f32.mrf.mxu0
        %v846 = vadd.f32 0.0, %v845
        %v847 = vpop.f32.mrf.mxu0
        %848 = vmatprep.mubr.bf16.mxu0 %v651
        %849 = vmatmul.mubr.bf16.gmra.mxu0 %v650
        %v850 = vpop.f32.mrf.mxu0
        %v851 = vadd.f32 0.0, %v850
        %v852 = vpop.f32.mrf.mxu0
        %v853 = vpop.f32.mrf.mxu0
        %v854 = vadd.f32 0.0, %v853
        %v855 = vpop.f32.mrf.mxu0
        %856 = vmatprep.mubr.bf16.mxu0 %v653
        %857 = vmatmul.mubr.bf16.gmra.mxu0 %v652
        %v858 = vpop.f32.mrf.mxu0
        %v859 = vadd.f32 0.0, %v858
        %v860 = vpop.f32.mrf.mxu0
        %v861 = vpop.f32.mrf.mxu0
        %v862 = vadd.f32 0.0, %v861
        %v863 = vpop.f32.mrf.mxu0
        %864 = vmatprep.mubr.bf16.mxu0 %v655
        %865 = vmatmul.mubr.bf16.gmra.mxu0 %v654
        %v866 = vpop.f32.mrf.mxu0
        %v867 = vadd.f32 0.0, %v866
        %v868 = vpop.f32.mrf.mxu0
        %v869 = vpop.f32.mrf.mxu0
        %v870 = vadd.f32 0.0, %v869
        %v871 = vpop.f32.mrf.mxu0
        %872 = vmatprep.mubr.bf16.mxu0 %v657
        %873 = vmatmul.mubr.bf16.gmra.mxu0 %v656
        %v874 = vpop.f32.mrf.mxu0
        %v875 = vadd.f32 0.0, %v874
        %v876 = vpop.f32.mrf.mxu0
        %v877 = vpop.f32.mrf.mxu0
        %v878 = vadd.f32 0.0, %v877
        %v879 = vpop.f32.mrf.mxu0
        %880 = vmatprep.mubr.bf16.mxu0 %v659
        %881 = vmatmul.mubr.bf16.gmra.mxu0 %v658
        %v882 = vpop.f32.mrf.mxu0
        %v883 = vadd.f32 0.0, %v882
        %v884 = vpop.f32.mrf.mxu0
        %v885 = vpop.f32.mrf.mxu0
        %v886 = vadd.f32 0.0, %v885
        %v887 = vpop.f32.mrf.mxu0
        %888 = vmatprep.mubr.bf16.mxu0 %v661
        %889 = vmatmul.mubr.bf16.gmra.mxu0 %v660
        %v890 = vpop.f32.mrf.mxu0
        %v891 = vadd.f32 0.0, %v890
        %v892 = vpop.f32.mrf.mxu0
        %v893 = vpop.f32.mrf.mxu0
        %v894 = vadd.f32 0.0, %v893
        %v895 = vpop.f32.mrf.mxu0
        %896 = vmatprep.mubr.bf16.mxu0 %v663
        %897 = vmatmul.mubr.bf16.gmra.mxu0 %v662
        %v898 = vpop.f32.mrf.mxu0
        %v899 = vadd.f32 0.0, %v898
        %v900 = vpop.f32.mrf.mxu0
        %v901 = vpop.f32.mrf.mxu0
        %v902 = vadd.f32 0.0, %v901
        %v903 = vpop.f32.mrf.mxu0
        %904 = vmatprep.mubr.bf16.mxu0 %v665
        %905 = vmatmul.mubr.bf16.gmra.mxu0 %v664
        %v906 = vpop.f32.mrf.mxu0
        %v907 = vadd.f32 0.0, %v906
        %v908 = vpop.f32.mrf.mxu0
        %v909 = vpop.f32.mrf.mxu0
        %v910 = vadd.f32 0.0, %v909
        %v911 = vpop.f32.mrf.mxu0
        %912 = vmatprep.mubr.bf16.mxu0 %v667
        %913 = vmatmul.mubr.bf16.gmra.mxu0 %v666
        %v914 = vpop.f32.mrf.mxu0
        %v915 = vadd.f32 0.0, %v914
        %v916 = vpop.f32.mrf.mxu0
        %v917 = vpop.f32.mrf.mxu0
        %v918 = vadd.f32 0.0, %v917
        %v919 = vpop.f32.mrf.mxu0
        %920 = vmatprep.mubr.bf16.mxu0 %v669
        %921 = vmatmul.mubr.bf16.gmra.mxu0 %v668
        %v922 = vpop.f32.mrf.mxu0
        %v923 = vadd.f32 0.0, %v922
        %v924 = vpop.f32.mrf.mxu0
        %v925 = vpop.f32.mrf.mxu0
        %v926 = vadd.f32 0.0, %v925
        %v927 = vpop.f32.mrf.mxu0
        %928 = vmatprep.mubr.bf16.mxu0 %v671
        %929 = vmatmul.mubr.bf16.gmra.mxu0 %v670
        %v930 = vpop.f32.mrf.mxu0
        %v931 = vadd.f32 0.0, %v930
        %v932 = vpop.f32.mrf.mxu0
        %v933 = vpop.f32.mrf.mxu0
        %v934 = vadd.f32 0.0, %v933
        %v935 = vpop.f32.mrf.mxu0
        %936 = vmatprep.mubr.bf16.mxu0 %v673
        %937 = vmatmul.mubr.bf16.gmra.mxu0 %v672
        %v938 = vpop.f32.mrf.mxu0
        %v939 = vadd.f32 0.0, %v938
        %v940 = vpop.f32.mrf.mxu0
        %v941 = vpop.f32.mrf.mxu0
        %v942 = vadd.f32 0.0, %v941
        %v943 = vpop.f32.mrf.mxu0
        %944 = vmatprep.mubr.bf16.mxu0 %v675
        %945 = vmatmul.mubr.bf16.gmra.mxu0 %v674
        %v946 = vpop.f32.mrf.mxu0
        %v947 = vadd.f32 0.0, %v946
        %v948 = vpop.f32.mrf.mxu0
        %v949 = vpop.f32.mrf.mxu0
        %v950 = vadd.f32 0.0, %v949
        %v951 = vpop.f32.mrf.mxu0
        %952 = vmatprep.mubr.bf16.mxu0 %v677
        %953 = vmatmul.mubr.bf16.gmra.mxu0 %v676
        %v954 = vpop.f32.mrf.mxu0
        %v955 = vadd.f32 0.0, %v954
        %v956 = vpop.f32.mrf.mxu0
        %v957 = vpop.f32.mrf.mxu0
        %v958 = vadd.f32 0.0, %v957
        %v959 = vpop.f32.mrf.mxu0
        %960 = vmatprep.mubr.bf16.mxu0 %v679
        %961 = vmatmul.mubr.bf16.gmra.mxu0 %v678
        %v962 = vpop.f32.mrf.mxu0
        %v963 = vadd.f32 0.0, %v962
        %v964 = vpop.f32.mrf.mxu0
        %v965 = vpop.f32.mrf.mxu0
        %v966 = vadd.f32 0.0, %v965
        %v967 = vpop.f32.mrf.mxu0
        %968 = vdwg.mxu0
        %v969 = vadd.f32 %v452, %v843
        %v970 = vadd.f32 %v453, %v846
        %v971 = vadd.f32 %v454, %v851
        %v972 = vadd.f32 %v455, %v854
        %v973 = vadd.f32 %v456, %v859
        %v974 = vadd.f32 %v457, %v862
        %v975 = vadd.f32 %v458, %v867
        %v976 = vadd.f32 %v459, %v870
        %v977 = vadd.f32 %v460, %v875
        %v978 = vadd.f32 %v461, %v878
        %v979 = vadd.f32 %v462, %v883
        %v980 = vadd.f32 %v463, %v886
        %v981 = vadd.f32 %v464, %v891
        %v982 = vadd.f32 %v465, %v894
        %v983 = vadd.f32 %v466, %v899
        %v984 = vadd.f32 %v467, %v902
        %v985 = vadd.f32 %v468, %v907
        %v986 = vadd.f32 %v469, %v910
        %v987 = vadd.f32 %v470, %v915
        %v988 = vadd.f32 %v471, %v918
        %v989 = vadd.f32 %v472, %v923
        %v990 = vadd.f32 %v473, %v926
        %v991 = vadd.f32 %v474, %v931
        %v992 = vadd.f32 %v475, %v934
        %v993 = vadd.f32 %v476, %v939
        %v994 = vadd.f32 %v477, %v942
        %v995 = vadd.f32 %v478, %v947
        %v996 = vadd.f32 %v479, %v950
        %v997 = vadd.f32 %v480, %v955
        %v998 = vadd.f32 %v481, %v958
        %v999 = vadd.f32 %v482, %v963
        %v1000 = vadd.f32 %v483, %v966
        %1001 = vst [vmem:[#allocation2] sm:$0xff] %v969
        %1002 = vst [vmem:[#allocation2 + $0x8] sm:$0xff] %v970
        %1003 = vst [vmem:[#allocation2 + $0x10] sm:$0xff] %v971
        %1004 = vst [vmem:[#allocation2 + $0x18] sm:$0xff] %v972
        %1005 = vst [vmem:[#allocation2 + $0x20] sm:$0xff] %v973
        %1006 = vst [vmem:[#allocation2 + $0x28] sm:$0xff] %v974
        %1007 = vst [vmem:[#allocation2 + $0x30] sm:$0xff] %v975
        %1008 = vst [vmem:[#allocation2 + $0x38] sm:$0xff] %v976
        %1009 = vst [vmem:[#allocation2 + $0x40] sm:$0xff] %v977
        %1010 = vst [vmem:[#allocation2 + $0x48] sm:$0xff] %v978
        %1011 = vst [vmem:[#allocation2 + $0x50] sm:$0xff] %v979
        %1012 = vst [vmem:[#allocation2 + $0x58] sm:$0xff] %v980
        %1013 = vst [vmem:[#allocation2 + $0x60] sm:$0xff] %v981
        %1014 = vst [vmem:[#allocation2 + $0x68] sm:$0xff] %v982
        %1015 = vst [vmem:[#allocation2 + $0x70] sm:$0xff] %v983
        %1016 = vst [vmem:[#allocation2 + $0x78] sm:$0xff] %v984
        %1017 = vst [vmem:[#allocation2 + $0x80] sm:$0xff] %v985
        %1018 = vst [vmem:[#allocation2 + $0x88] sm:$0xff] %v986
        %1019 = vst [vmem:[#allocation2 + $0x90] sm:$0xff] %v987
        %1020 = vst [vmem:[#allocation2 + $0x98] sm:$0xff] %v988
        %1021 = vst [vmem:[#allocation2 + $0xa0] sm:$0xff] %v989
        %1022 = vst [vmem:[#allocation2 + $0xa8] sm:$0xff] %v990
        %1023 = vst [vmem:[#allocation2 + $0xb0] sm:$0xff] %v991
        %1024 = vst [vmem:[#allocation2 + $0xb8] sm:$0xff] %v992
        %1025 = vst [vmem:[#allocation2 + $0xc0] sm:$0xff] %v993
        %1026 = vst [vmem:[#allocation2 + $0xc8] sm:$0xff] %v994
        %1027 = vst [vmem:[#allocation2 + $0xd0] sm:$0xff] %v995
        %1028 = vst [vmem:[#allocation2 + $0xd8] sm:$0xff] %v996
        %1029 = vst [vmem:[#allocation2 + $0xe0] sm:$0xff] %v997
        %1030 = vst [vmem:[#allocation2 + $0xe8] sm:$0xff] %v998
        %1031 = vst [vmem:[#allocation2 + $0xf0] sm:$0xff] %v999
        %1032 = vst [vmem:[#allocation2 + $0xf8] sm:$0xff] %v1000
        %p1033 = scmp.eq.s32.totalorder %s21, 1
        // Predicated region
        $region75: #{llard_forward.2} parent=65 // pred_check
          %p1034 = pneg %p1033
        $region76: #{llard_forward.2} parent=65 // pred_check_branch
          %1036 = sbr.rel (%p1034) target = $region78
        $region77: #{llard_forward.2} parent=65 // pred_region
          %v1037 = vld [vmem:[#allocation2] sm:$0xff]
          %v1038 = vld [vmem:[#allocation2 + $0x8] sm:$0xff]
          %v1039 = vld [vmem:[#allocation2 + $0x10] sm:$0xff]
          %v1040 = vld [vmem:[#allocation2 + $0x18] sm:$0xff]
          %v1041 = vld [vmem:[#allocation2 + $0x20] sm:$0xff]
          %v1042 = vld [vmem:[#allocation2 + $0x28] sm:$0xff]
          %v1043 = vld [vmem:[#allocation2 + $0x30] sm:$0xff]
          %v1044 = vld [vmem:[#allocation2 + $0x38] sm:$0xff]
          %v1045 = vld [vmem:[#allocation2 + $0x40] sm:$0xff]
          %v1046 = vld [vmem:[#allocation2 + $0x48] sm:$0xff]
          %v1047 = vld [vmem:[#allocation2 + $0x50] sm:$0xff]
          %v1048 = vld [vmem:[#allocation2 + $0x58] sm:$0xff]
          %v1049 = vld [vmem:[#allocation2 + $0x60] sm:$0xff]
          %v1050 = vld [vmem:[#allocation2 + $0x68] sm:$0xff]
          %v1051 = vld [vmem:[#allocation2 + $0x70] sm:$0xff]
          %v1052 = vld [vmem:[#allocation2 + $0x78] sm:$0xff]
          %v1053 = vld [vmem:[#allocation2 + $0x80] sm:$0xff]
          %v1054 = vld [vmem:[#allocation2 + $0x88] sm:$0xff]
          %v1055 = vld [vmem:[#allocation2 + $0x90] sm:$0xff]
          %v1056 = vld [vmem:[#allocation2 + $0x98] sm:$0xff]
          %v1057 = vld [vmem:[#allocation2 + $0xa0] sm:$0xff]
          %v1058 = vld [vmem:[#allocation2 + $0xa8] sm:$0xff]
          %v1059 = vld [vmem:[#allocation2 + $0xb0] sm:$0xff]
          %v1060 = vld [vmem:[#allocation2 + $0xb8] sm:$0xff]
          %v1061 = vld [vmem:[#allocation2 + $0xc0] sm:$0xff]
          %v1062 = vld [vmem:[#allocation2 + $0xc8] sm:$0xff]
          %v1063 = vld [vmem:[#allocation2 + $0xd0] sm:$0xff]
          %v1064 = vld [vmem:[#allocation2 + $0xd8] sm:$0xff]
          %v1065 = vld [vmem:[#allocation2 + $0xe0] sm:$0xff]
          %v1066 = vld [vmem:[#allocation2 + $0xe8] sm:$0xff]
          %v1067 = vld [vmem:[#allocation2 + $0xf0] sm:$0xff]
          %v1068 = vld [vmem:[#allocation2 + $0xf8] sm:$0xff]
          %v1069 = vld [vmem:[%s400] sm:$0xff]
          %v1070 = vld [vmem:[%s400 + $0x8] sm:$0xff]
          %v1071 = vld [vmem:[%s400 + $0x10] sm:$0xff]
          %v1072 = vld [vmem:[%s400 + $0x18] sm:$0xff]
          %v1073 = vld [vmem:[%s400 + $0x20] sm:$0xff]
          %v1074 = vld [vmem:[%s400 + $0x28] sm:$0xff]
          %v1075 = vld [vmem:[%s400 + $0x30] sm:$0xff]
          %v1076 = vld [vmem:[%s400 + $0x38] sm:$0xff]
          %v1077 = vld [vmem:[%s400 + $0x40] sm:$0xff]
          %v1078 = vld [vmem:[%s400 + $0x48] sm:$0xff]
          %v1079 = vld [vmem:[%s400 + $0x50] sm:$0xff]
          %v1080 = vld [vmem:[%s400 + $0x58] sm:$0xff]
          %v1081 = vld [vmem:[%s400 + $0x60] sm:$0xff]
          %v1082 = vld [vmem:[%s400 + $0x68] sm:$0xff]
          %v1083 = vld [vmem:[%s400 + $0x70] sm:$0xff]
          %v1084 = vld [vmem:[%s400 + $0x78] sm:$0xff]
          %v1085 = vld [vmem:[%s400 + $0x80] sm:$0xff]
          %v1086 = vld [vmem:[%s400 + $0x88] sm:$0xff]
          %v1087 = vld [vmem:[%s400 + $0x90] sm:$0xff]
          %v1088 = vld [vmem:[%s400 + $0x98] sm:$0xff]
          %v1089 = vld [vmem:[%s400 + $0xa0] sm:$0xff]
          %v1090 = vld [vmem:[%s400 + $0xa8] sm:$0xff]
          %v1091 = vld [vmem:[%s400 + $0xb0] sm:$0xff]
          %v1092 = vld [vmem:[%s400 + $0xb8] sm:$0xff]
          %v1093 = vld [vmem:[%s400 + $0xc0] sm:$0xff]
          %v1094 = vld [vmem:[%s400 + $0xc8] sm:$0xff]
          %v1095 = vld [vmem:[%s400 + $0xd0] sm:$0xff]
          %v1096 = vld [vmem:[%s400 + $0xd8] sm:$0xff]
          %v1097 = vld [vmem:[%s400 + $0xe0] sm:$0xff]
          %v1098 = vld [vmem:[%s400 + $0xe8] sm:$0xff]
          %v1099 = vld [vmem:[%s400 + $0xf0] sm:$0xff]
          %v1100 = vld [vmem:[%s400 + $0xf8] sm:$0xff]
          %v1101 = vadd.f32 %v1069, %v1037
          %v1102 = vadd.f32 %v1070, %v1038
          %v1103 = vadd.f32 %v1071, %v1039
          %v1104 = vadd.f32 %v1072, %v1040
          %v1105 = vadd.f32 %v1073, %v1041
          %v1106 = vadd.f32 %v1074, %v1042
          %v1107 = vadd.f32 %v1075, %v1043
          %v1108 = vadd.f32 %v1076, %v1044
          %v1109 = vadd.f32 %v1077, %v1045
          %v1110 = vadd.f32 %v1078, %v1046
          %v1111 = vadd.f32 %v1079, %v1047
          %v1112 = vadd.f32 %v1080, %v1048
          %v1113 = vadd.f32 %v1081, %v1049
          %v1114 = vadd.f32 %v1082, %v1050
          %v1115 = vadd.f32 %v1083, %v1051
          %v1116 = vadd.f32 %v1084, %v1052
          %v1117 = vadd.f32 %v1085, %v1053
          %v1118 = vadd.f32 %v1086, %v1054
          %v1119 = vadd.f32 %v1087, %v1055
          %v1120 = vadd.f32 %v1088, %v1056
          %v1121 = vadd.f32 %v1089, %v1057
          %v1122 = vadd.f32 %v1090, %v1058
          %v1123 = vadd.f32 %v1091, %v1059
          %v1124 = vadd.f32 %v1092, %v1060
          %v1125 = vadd.f32 %v1093, %v1061
          %v1126 = vadd.f32 %v1094, %v1062
          %v1127 = vadd.f32 %v1095, %v1063
          %v1128 = vadd.f32 %v1096, %v1064
          %v1129 = vadd.f32 %v1097, %v1065
          %v1130 = vadd.f32 %v1098, %v1066
          %v1131 = vadd.f32 %v1099, %v1067
          %v1132 = vadd.f32 %v1100, %v1068
          %1133 = vst [vmem:[%s406] sm:$0xff] %v1101
          %1134 = vst [vmem:[%s406 + $0x8] sm:$0xff] %v1102
          %1135 = vst [vmem:[%s406 + $0x10] sm:$0xff] %v1103
          %1136 = vst [vmem:[%s406 + $0x18] sm:$0xff] %v1104
          %1137 = vst [vmem:[%s406 + $0x20] sm:$0xff] %v1105
          %1138 = vst [vmem:[%s406 + $0x28] sm:$0xff] %v1106
          %1139 = vst [vmem:[%s406 + $0x30] sm:$0xff] %v1107
          %1140 = vst [vmem:[%s406 + $0x38] sm:$0xff] %v1108
          %1141 = vst [vmem:[%s406 + $0x40] sm:$0xff] %v1109
          %1142 = vst [vmem:[%s406 + $0x48] sm:$0xff] %v1110
          %1143 = vst [vmem:[%s406 + $0x50] sm:$0xff] %v1111
          %1144 = vst [vmem:[%s406 + $0x58] sm:$0xff] %v1112
          %1145 = vst [vmem:[%s406 + $0x60] sm:$0xff] %v1113
          %1146 = vst [vmem:[%s406 + $0x68] sm:$0xff] %v1114
          %1147 = vst [vmem:[%s406 + $0x70] sm:$0xff] %v1115
          %1148 = vst [vmem:[%s406 + $0x78] sm:$0xff] %v1116
          %1149 = vst [vmem:[%s406 + $0x80] sm:$0xff] %v1117
          %1150 = vst [vmem:[%s406 + $0x88] sm:$0xff] %v1118
          %1151 = vst [vmem:[%s406 + $0x90] sm:$0xff] %v1119
          %1152 = vst [vmem:[%s406 + $0x98] sm:$0xff] %v1120
          %1153 = vst [vmem:[%s406 + $0xa0] sm:$0xff] %v1121
          %1154 = vst [vmem:[%s406 + $0xa8] sm:$0xff] %v1122
          %1155 = vst [vmem:[%s406 + $0xb0] sm:$0xff] %v1123
          %1156 = vst [vmem:[%s406 + $0xb8] sm:$0xff] %v1124
          %1157 = vst [vmem:[%s406 + $0xc0] sm:$0xff] %v1125
          %1158 = vst [vmem:[%s406 + $0xc8] sm:$0xff] %v1126
          %1159 = vst [vmem:[%s406 + $0xd0] sm:$0xff] %v1127
          %1160 = vst [vmem:[%s406 + $0xd8] sm:$0xff] %v1128
          %1161 = vst [vmem:[%s406 + $0xe0] sm:$0xff] %v1129
          %1162 = vst [vmem:[%s406 + $0xe8] sm:$0xff] %v1130
          %1163 = vst [vmem:[%s406 + $0xf0] sm:$0xff] %v1131
          %1164 = vst [vmem:[%s406 + $0xf8] sm:$0xff] %v1132
          %v1165 = vpack.c.bf16 %v1038, %v1037
          %v1166 = vpack.c.bf16 %v1040, %v1039
          %v1167 = vpack.c.bf16 %v1042, %v1041
          %v1168 = vpack.c.bf16 %v1044, %v1043
          %v1169 = vpack.c.bf16 %v1046, %v1045
          %v1170 = vpack.c.bf16 %v1048, %v1047
          %v1171 = vpack.c.bf16 %v1050, %v1049
          %v1172 = vpack.c.bf16 %v1052, %v1051
          %v1173 = vpack.c.bf16 %v1054, %v1053
          %v1174 = vpack.c.bf16 %v1056, %v1055
          %v1175 = vpack.c.bf16 %v1058, %v1057
          %v1176 = vpack.c.bf16 %v1060, %v1059
          %v1177 = vpack.c.bf16 %v1062, %v1061
          %v1178 = vpack.c.bf16 %v1064, %v1063
          %v1179 = vpack.c.bf16 %v1066, %v1065
          %v1180 = vpack.c.bf16 %v1068, %v1067
          %v1197 = vunpack.c.l.b16 %v1165
          %v1198 = vunpack.c.h.b16 %v1165
          %v1199 = vunpack.c.l.b16 %v1166
          %v1200 = vunpack.c.h.b16 %v1166
          %v1201 = vunpack.c.l.b16 %v1167
          %v1202 = vunpack.c.h.b16 %v1167
          %v1203 = vunpack.c.l.b16 %v1168
          %v1204 = vunpack.c.h.b16 %v1168
          %v1205 = vunpack.c.l.b16 %v1169
          %v1206 = vunpack.c.h.b16 %v1169
          %v1207 = vunpack.c.l.b16 %v1170
          %v1208 = vunpack.c.h.b16 %v1170
          %v1209 = vunpack.c.l.b16 %v1171
          %v1210 = vunpack.c.h.b16 %v1171
          %v1211 = vunpack.c.l.b16 %v1172
          %v1212 = vunpack.c.h.b16 %v1172
          %v1213 = vunpack.c.l.b16 %v1173
          %v1214 = vunpack.c.h.b16 %v1173
          %v1215 = vunpack.c.l.b16 %v1174
          %v1216 = vunpack.c.h.b16 %v1174
          %v1217 = vunpack.c.l.b16 %v1175
          %v1218 = vunpack.c.h.b16 %v1175
          %v1219 = vunpack.c.l.b16 %v1176
          %v1220 = vunpack.c.h.b16 %v1176
          %v1221 = vunpack.c.l.b16 %v1177
          %v1222 = vunpack.c.h.b16 %v1177
          %v1223 = vunpack.c.l.b16 %v1178
          %v1224 = vunpack.c.h.b16 %v1178
          %v1225 = vunpack.c.l.b16 %v1179
          %v1226 = vunpack.c.h.b16 %v1179
          %v1227 = vunpack.c.l.b16 %v1180
          %v1228 = vunpack.c.h.b16 %v1180
          %v1229 = vpack.c.b16 %v1197, %v1197
          %v1230 = vpack.c.b16 %v1198, %v1198
          %v1231 = vpack.c.b16 %v1199, %v1199
          %v1232 = vpack.c.b16 %v1200, %v1200
          %v1233 = vpack.c.b16 %v1201, %v1201
          %v1234 = vpack.c.b16 %v1202, %v1202
          %v1235 = vpack.c.b16 %v1203, %v1203
          %v1236 = vpack.c.b16 %v1204, %v1204
          %v1237 = vpack.c.b16 %v1205, %v1205
          %v1238 = vpack.c.b16 %v1206, %v1206
          %v1239 = vpack.c.b16 %v1207, %v1207
          %v1240 = vpack.c.b16 %v1208, %v1208
          %v1241 = vpack.c.b16 %v1209, %v1209
          %v1242 = vpack.c.b16 %v1210, %v1210
          %v1243 = vpack.c.b16 %v1211, %v1211
          %v1244 = vpack.c.b16 %v1212, %v1212
          %v1245 = vpack.c.b16 %v1213, %v1213
          %v1246 = vpack.c.b16 %v1214, %v1214
          %v1247 = vpack.c.b16 %v1215, %v1215
          %v1248 = vpack.c.b16 %v1216, %v1216
          %v1249 = vpack.c.b16 %v1217, %v1217
          %v1250 = vpack.c.b16 %v1218, %v1218
          %v1251 = vpack.c.b16 %v1219, %v1219
          %v1252 = vpack.c.b16 %v1220, %v1220
          %v1253 = vpack.c.b16 %v1221, %v1221
          %v1254 = vpack.c.b16 %v1222, %v1222
          %v1255 = vpack.c.b16 %v1223, %v1223
          %v1256 = vpack.c.b16 %v1224, %v1224
          %v1257 = vpack.c.b16 %v1225, %v1225
          %v1258 = vpack.c.b16 %v1226, %v1226
          %v1259 = vpack.c.b16 %v1227, %v1227
          %v1260 = vpack.c.b16 %v1228, %v1228
          %1293 = vst [vmem:[%s412] sm:$0xf] %v1229
          %1294 = vst [vmem:[%s412 + $0x4] sm:$0xf] %v1230
          %1295 = vst [vmem:[%s412 + $0x8] sm:$0xf] %v1231
          %1296 = vst [vmem:[%s412 + $0xc] sm:$0xf] %v1232
          %1297 = vst [vmem:[%s412 + $0x10] sm:$0xf] %v1233
          %1298 = vst [vmem:[%s412 + $0x14] sm:$0xf] %v1234
          %1299 = vst [vmem:[%s412 + $0x18] sm:$0xf] %v1235
          %1300 = vst [vmem:[%s412 + $0x1c] sm:$0xf] %v1236
          %1301 = vst [vmem:[%s412 + $0x20] sm:$0xf] %v1237
          %1302 = vst [vmem:[%s412 + $0x24] sm:$0xf] %v1238
          %1303 = vst [vmem:[%s412 + $0x28] sm:$0xf] %v1239
          %1304 = vst [vmem:[%s412 + $0x2c] sm:$0xf] %v1240
          %1305 = vst [vmem:[%s412 + $0x30] sm:$0xf] %v1241
          %1306 = vst [vmem:[%s412 + $0x34] sm:$0xf] %v1242
          %1307 = vst [vmem:[%s412 + $0x38] sm:$0xf] %v1243
          %1308 = vst [vmem:[%s412 + $0x3c] sm:$0xf] %v1244
          %1309 = vst [vmem:[%s412 + $0x40] sm:$0xf] %v1245
          %1310 = vst [vmem:[%s412 + $0x44] sm:$0xf] %v1246
          %1311 = vst [vmem:[%s412 + $0x48] sm:$0xf] %v1247
          %1312 = vst [vmem:[%s412 + $0x4c] sm:$0xf] %v1248
          %1313 = vst [vmem:[%s412 + $0x50] sm:$0xf] %v1249
          %1314 = vst [vmem:[%s412 + $0x54] sm:$0xf] %v1250
          %1315 = vst [vmem:[%s412 + $0x58] sm:$0xf] %v1251
          %1316 = vst [vmem:[%s412 + $0x5c] sm:$0xf] %v1252
          %1317 = vst [vmem:[%s412 + $0x60] sm:$0xf] %v1253
          %1318 = vst [vmem:[%s412 + $0x64] sm:$0xf] %v1254
          %1319 = vst [vmem:[%s412 + $0x68] sm:$0xf] %v1255
          %1320 = vst [vmem:[%s412 + $0x6c] sm:$0xf] %v1256
          %1321 = vst [vmem:[%s412 + $0x70] sm:$0xf] %v1257
          %1322 = vst [vmem:[%s412 + $0x74] sm:$0xf] %v1258
          %1323 = vst [vmem:[%s412 + $0x78] sm:$0xf] %v1259
          %1324 = vst [vmem:[%s412 + $0x7c] sm:$0xf] %v1260
        $region78: #{llard_forward.2} parent=65 // pred_fallthru
          _
        %s1325 = smul.u32 32, %s20
        %p1326 = scmp.lt.s32.totalorder %s1325, 63
        %s1327 = scalar_select %p1326, %s1325, 63
        %s1328 = smul.addr %s1327, 8
        %s1329 = scalar_lea.vmem %s3, %s1328
        %s1330 = smul.u32 32, %s20
        %p1331 = scmp.lt.s32.totalorder %s1330, 63
        %s1332 = scalar_select %p1331, %s1330, 63
        %s1333 = smul.addr %s1332, 4
        %s1334 = scalar_lea.vmem %s4, %s1333
        // Predicated region
        $region79: #{llard_forward.2} parent=65 // pred_check
          %p1335 = pneg %p121
        $region80: #{llard_forward.2} parent=65 // pred_check_branch
          %1337 = sbr.rel (%p1335) target = $region82
        $region81: #{llard_forward.2} parent=65 // pred_region
          %s1338 = smul.u32 32, %s20
        $region82: #{llard_forward.2} parent=65 // pred_fallthru
          _
        // Predicated region
        $region83: #{llard_forward.2} parent=65 // pred_check
          %p1339 = pneg %p147
        $region84: #{llard_forward.2} parent=65 // pred_check_branch
          %1341 = sbr.rel (%p1339) target = $region86
        $region85: #{llard_forward.2} parent=65 // pred_region
          %s1342 = smul.u32 32, %s20
        $region86: #{llard_forward.2} parent=65 // pred_fallthru
          _
      $region66: #{llard_forward.2} parent=5 // pred_fallthru
        _
      %p1343 = scmp.le.s32.totalorder 2, %s11
      // Predicated region
      $region87: #{llard_forward.2} parent=5 // pred_check
        %p1344 = pneg %p1343
      $region88: #{llard_forward.2} parent=5 // pred_check_branch
        %1346 = sbr.rel (%p1344) target = $region90
      $region89: #{llard_forward.2} parent=5 // pred_region
        %s1347 = ssub.s32 %s11, 2
        // Predicated region
        $region91: #{llard_forward.2} parent=89 // pred_check
          %p1348 = pneg %p127
        $region92: #{llard_forward.2} parent=89 // pred_check_branch
          %1350 = sbr.rel (%p1348) target = $region94
        $region93: #{llard_forward.2} parent=89 // pred_region
          %s1351 = smul.u32 32, %s22
          %p1352 = scmp.lt.s32.totalorder %s1351, 63
          %s1353 = scalar_select %p1352, %s1351, 63
          %s1354 = smul.addr %s1353, 8
          %s1355 = scalar_lea.vmem %s3, %s1354
        $region94: #{llard_forward.2} parent=89 // pred_fallthru
          _
        // Predicated region
        $region95: #{llard_forward.2} parent=89 // pred_check
          %p1356 = pneg %p153
        $region96: #{llard_forward.2} parent=89 // pred_check_branch
          %1358 = sbr.rel (%p1356) target = $region98
        $region97: #{llard_forward.2} parent=89 // pred_region
          %s1359 = smul.u32 32, %s22
          %p1360 = scmp.lt.s32.totalorder %s1359, 63
          %s1361 = scalar_select %p1360, %s1359, 63
          %s1362 = smul.addr %s1361, 4
          %s1363 = scalar_lea.vmem %s4, %s1362
        $region98: #{llard_forward.2} parent=89 // pred_fallthru
          _
      $region90: #{llard_forward.2} parent=5 // pred_fallthru
        _
    $region6: #{llard_forward.2} parent=1 // loop_footer
      %s15 = sadd.s32 1, %s11
    $region7: #{llard_forward.2} parent=1 // loop_footer_branch
      %10 = sbr.rel target = $region3
    $region8: #{llard_forward.2} parent=1 // loop_exit
      _

</llo_original>
